<compile_context>
chip_gen: v6e
topology: v6e:2x2x1
jax: 0.10.0
libtpu: 0.0.40
codegen_flags: <defaults>
</compile_context>

<pallas_src>
import jax
import jax.numpy as jnp
from jax.experimental import pallas as pl
from jax.experimental.pallas import tpu as pltpu


def _make_mlp_kernel(num_layers):
    """Kernel refs = (x, w0, b0, w1, b1, ..., out).

    x block:   (C_in, tile_s)        (batch dim squeezed out)
    w_l:       (C_out_l, C_in_l)     bf16 (resident in VMEM)
    b_l:       (C_out_l, 1)          f32
    out block: (C_out, tile_s)
    """

    def kernel(x_ref, *refs):
        o_ref = refs[-1]
        params = refs[:-1]
        h = x_ref[...].astype(jnp.float32)                     # (C_in, tile_s) f32
        for l in range(num_layers):
            w = params[2 * l][...]                             # (C_out_l, C_in_l) bf16
            b = params[2 * l + 1][...]                         # (C_out_l, 1) f32
            # bf16 operands -> single-pass MXU; f32 accumulate; f32 bias add.
            h = jnp.dot(w, h.astype(jnp.bfloat16),
                        preferred_element_type=jnp.float32) + b
            if l < num_layers - 1:
                h = jnp.tanh(h)                                # f32 tanh (v5e-safe)
        o_ref[...] = h.astype(o_ref.dtype)

    return kernel


def _choose_tile(s, requested):
    """Pick a spatial tile: whole extent if it fits, else a multiple of 256."""
    if s <= requested:
        return s                       # full-dim block: divisibility rule waived
    t = (requested // 256) * 256       # MXU N axis is 256-wide on v6e/v7x
    return max(t, 256)


def smaller_cell_update_net(x_ncdhw, weights, biases, *, tile_s=8192):
    """Apply the fused 1x1x1-conv MLP to x (NCDHW) with a Pallas kernel.

    weights[l]: (C_out_l, C_in_l)   (PyTorch Conv3d orientation)
    biases[l]:  (C_out_l, 1)
    """
    n, c_in, d, h, w = x_ncdhw.shape
    num_layers = len(weights)
    c_out = weights[-1].shape[0]
    s = d * h * w

    tile_s = _choose_tile(s, tile_s)
    assert tile_s == s or tile_s % 256 == 0, "tile_s must be mult of 256 or full S"

    # Free reshape: channels on sublanes, spatial on lanes.  No pad, no slice.
    x3 = x_ncdhw.reshape(n, c_in, s)

    grid = (n, pl.cdiv(s, tile_s))

    in_specs = [
        # batch dim squeezed out of the kernel view.
        pl.BlockSpec((None, c_in, tile_s), lambda i, j: (i, 0, j)),
    ]
    args = [x3]
    for wmat, bvec in zip(weights, biases):
        # Weights resident in VMEM (constant index_map), pre-cast to bf16.
        in_specs.append(pl.BlockSpec(wmat.shape, lambda i, j: (0, 0)))
        in_specs.append(pl.BlockSpec(bvec.shape, lambda i, j: (0, 0)))
        args.append(wmat.astype(jnp.bfloat16))
        args.append(bvec.astype(jnp.float32))

    out3 = pl.pallas_call(
        _make_mlp_kernel(num_layers),
        out_shape=jax.ShapeDtypeStruct((n, c_out, s), x_ncdhw.dtype),
        grid=grid,
        in_specs=in_specs,
        out_specs=pl.BlockSpec((None, c_out, tile_s), lambda i, j: (i, 0, j)),
        compiler_params=pltpu.CompilerParams(
            dimension_semantics=("parallel", "parallel")
        ),
    )(*args)

    return out3.reshape(n, c_out, d, h, w)


def init_params(key, in_channels, out_channels, bias=True):
    """Deterministic init matching make_sequental_3d layer shapes.

    Layer l maps C_in_l -> C_out_l; weights stored as (C_out_l, C_in_l) so the
    kernel computes W @ h (channels-on-sublanes orientation).
    """
    dims = [in_channels * 3] + list(out_channels) + [in_channels]
    weights, biases = [], []
    for l in range(len(dims) - 1):
        cin, cout = dims[l], dims[l + 1]
        key, kw, kb = jax.random.split(key, 3)
        bound = 1.0 / jnp.sqrt(jnp.float32(cin))
        wmat = jax.random.uniform(kw, (cout, cin), jnp.float32, -bound, bound)
        bvec = (jax.random.uniform(kb, (cout, 1), jnp.float32, -bound, bound)
                if bias else jnp.zeros((cout, 1), jnp.float32))
        weights.append(wmat)
        biases.append(bvec)
    return weights, biases


def reference_forward(x_ncdhw, weights, biases):
    """Pure-JAX f32 reference of the same forward pass (for sanity check)."""
    n, c, d, h, w = x_ncdhw.shape
    hdd = x_ncdhw.reshape(n, c, -1)
    num_layers = len(weights)
    for l in range(num_layers):
        hdd = jnp.einsum("oc,ncs->nos", weights[l], hdd,
                         precision=jax.lax.Precision.HIGHEST) + biases[l][None]
        if l < num_layers - 1:
            hdd = jnp.tanh(hdd)
    return hdd.reshape(n, -1, d, h, w)


if __name__ == "__main__":
    key = jax.random.PRNGKey(0)

    in_channels = 4
    out_channels = [32, 16]          # hidden widths of the update net
    n, d, h, w = 2, 8, 16, 16        # S = 8*16*16 = 2048 per batch

    key, kp, kx = jax.random.split(key, 3)
    weights, biases = init_params(kp, in_channels, out_channels, bias=True)

    # Module input: perception vector with in_channels*3 channels, NCDHW.
    x = jax.random.normal(kx, (n, in_channels * 3, d, h, w), jnp.float32)

    y = smaller_cell_update_net(x, weights, biases)
    y = jax.block_until_ready(y)

    # Reference is full-f32; kernel uses bf16 MXU operands -> relaxed tolerance.
    y_ref = reference_forward(x, weights, biases)
    assert y.shape == (n, in_channels, d, h, w)
    assert jnp.allclose(y, y_ref, atol=2e-2, rtol=2e-2), (
        float(jnp.max(jnp.abs(y - y_ref))))

    print("KERNEL_OK")
</pallas_src>

<mosaic_0001>
module attributes {stable_mosaic.version = 11 : i64} {
  func.func @kernel(%arg0: i32, %arg1: i32, %arg2: memref<1x12x2048xf32, #tpu.memory_space<vmem>>, %arg3: memref<32x12xbf16, #tpu.memory_space<vmem>>, %arg4: memref<32x1xf32, #tpu.memory_space<vmem>>, %arg5: memref<16x32xbf16, #tpu.memory_space<vmem>>, %arg6: memref<16x1xf32, #tpu.memory_space<vmem>>, %arg7: memref<4x16xbf16, #tpu.memory_space<vmem>>, %arg8: memref<4x1xf32, #tpu.memory_space<vmem>>, %arg9: memref<1x4x2048xf32, #tpu.memory_space<vmem>>) attributes {dimension_semantics = [#tpu.dimension_semantics<parallel>, #tpu.dimension_semantics<parallel>], iteration_bounds = array<i64: 2, 1>, scalar_prefetch = 0 : i64, scratch_operands = 0 : i64, tpu.core_type = #tpu.core_type<tc>, window_params = [{transform_indices = @transform_0, window_bounds = array<i64: 1, 12, 2048>}, {pipeline_mode = #tpu.pipeline_mode<synchronous>, transform_indices = @transform_1, window_bounds = array<i64: 32, 12>}, {pipeline_mode = #tpu.pipeline_mode<synchronous>, transform_indices = @transform_2, window_bounds = array<i64: 32, 1>}, {pipeline_mode = #tpu.pipeline_mode<synchronous>, transform_indices = @transform_3, window_bounds = array<i64: 16, 32>}, {pipeline_mode = #tpu.pipeline_mode<synchronous>, transform_indices = @transform_4, window_bounds = array<i64: 16, 1>}, {pipeline_mode = #tpu.pipeline_mode<synchronous>, transform_indices = @transform_5, window_bounds = array<i64: 4, 16>}, {pipeline_mode = #tpu.pipeline_mode<synchronous>, transform_indices = @transform_6, window_bounds = array<i64: 4, 1>}, {transform_indices = @transform_7, window_bounds = array<i64: 1, 4, 2048>}]} {
    %c0 = arith.constant 0 : index
    %c0_0 = arith.constant 0 : index
    %c0_1 = arith.constant 0 : index
    %0 = vector.load %arg2[%c0, %c0_0, %c0_1] : memref<1x12x2048xf32, #tpu.memory_space<vmem>>, vector<1x12x2048xf32>
    %1 = vector.shape_cast %0 : vector<1x12x2048xf32> to vector<12x2048xf32>
    %c0_2 = arith.constant 0 : index
    %c0_3 = arith.constant 0 : index
    %2 = vector.load %arg3[%c0_2, %c0_3] : memref<32x12xbf16, #tpu.memory_space<vmem>>, vector<32x12xbf16>
    %c0_4 = arith.constant 0 : index
    %c0_5 = arith.constant 0 : index
    %3 = vector.load %arg4[%c0_4, %c0_5] : memref<32x1xf32, #tpu.memory_space<vmem>>, vector<32x1xf32>
    %4 = arith.truncf %1 : vector<12x2048xf32> to vector<12x2048xbf16>
    %cst = arith.constant dense<0.000000e+00> : vector<32x2048xf32>
    %5 = tpu.matmul %2, %4, %cst {dimension_numbers = #tpu.dot_dimension_numbers<[1], [0], [0], [1], [0, 0, 1, 1], [], []>} : vector<32x12xbf16>, vector<12x2048xbf16>, vector<32x2048xf32> -> vector<32x2048xf32>
    %6 = vector.broadcast %3 : vector<32x1xf32> to vector<32x2048xf32>
    %7 = arith.addf %5, %6 : vector<32x2048xf32>
    %8 = math.tanh %7 : vector<32x2048xf32>
    %c0_6 = arith.constant 0 : index
    %c0_7 = arith.constant 0 : index
    %9 = vector.load %arg5[%c0_6, %c0_7] : memref<16x32xbf16, #tpu.memory_space<vmem>>, vector<16x32xbf16>
    %c0_8 = arith.constant 0 : index
    %c0_9 = arith.constant 0 : index
    %10 = vector.load %arg6[%c0_8, %c0_9] : memref<16x1xf32, #tpu.memory_space<vmem>>, vector<16x1xf32>
    %11 = arith.truncf %8 : vector<32x2048xf32> to vector<32x2048xbf16>
    %cst_10 = arith.constant dense<0.000000e+00> : vector<16x2048xf32>
    %12 = tpu.matmul %9, %11, %cst_10 {dimension_numbers = #tpu.dot_dimension_numbers<[1], [0], [0], [1], [0, 0, 1, 1], [], []>} : vector<16x32xbf16>, vector<32x2048xbf16>, vector<16x2048xf32> -> vector<16x2048xf32>
    %13 = vector.broadcast %10 : vector<16x1xf32> to vector<16x2048xf32>
    %14 = arith.addf %12, %13 : vector<16x2048xf32>
    %15 = math.tanh %14 : vector<16x2048xf32>
    %c0_11 = arith.constant 0 : index
    %c0_12 = arith.constant 0 : index
    %16 = vector.load %arg7[%c0_11, %c0_12] : memref<4x16xbf16, #tpu.memory_space<vmem>>, vector<4x16xbf16>
    %c0_13 = arith.constant 0 : index
    %c0_14 = arith.constant 0 : index
    %17 = vector.load %arg8[%c0_13, %c0_14] : memref<4x1xf32, #tpu.memory_space<vmem>>, vector<4x1xf32>
    %18 = arith.truncf %15 : vector<16x2048xf32> to vector<16x2048xbf16>
    %cst_15 = arith.constant dense<0.000000e+00> : vector<4x2048xf32>
    %19 = tpu.matmul %16, %18, %cst_15 {dimension_numbers = #tpu.dot_dimension_numbers<[1], [0], [0], [1], [0, 0, 1, 1], [], []>} : vector<4x16xbf16>, vector<16x2048xbf16>, vector<4x2048xf32> -> vector<4x2048xf32>
    %20 = vector.broadcast %17 : vector<4x1xf32> to vector<4x2048xf32>
    %21 = arith.addf %19, %20 : vector<4x2048xf32>
    %c0_16 = arith.constant 0 : index
    %c0_17 = arith.constant 0 : index
    %c0_18 = arith.constant 0 : index
    %22 = vector.load %arg9[%c0_16, %c0_17, %c0_18] : memref<1x4x2048xf32, #tpu.memory_space<vmem>>, vector<1x4x2048xf32>
    %23 = vector.shape_cast %22 : vector<1x4x2048xf32> to vector<4x2048xf32>
    %24 = vector.shape_cast %21 : vector<4x2048xf32> to vector<1x4x2048xf32>
    tpu.vector_store %arg9[%c0_16, %c0_17, %c0_18], %24 {strides = array<i32>} : memref<1x4x2048xf32, #tpu.memory_space<vmem>>, vector<1x4x2048xf32>,
    return
  }
  func.func @transform_0(%arg0: i32, %arg1: i32) -> (i32, i32, i32) {
    %c0_i32 = arith.constant 0 : i32
    %c0_i32_0 = arith.constant 0 : i32
    return %arg0, %c0_i32, %arg1 : i32, i32, i32
  }
  func.func @transform_1(%arg0: i32, %arg1: i32) -> (i32, i32) {
    %c0_i32 = arith.constant 0 : i32
    %c0_i32_0 = arith.constant 0 : i32
    %c0_i32_1 = arith.constant 0 : i32
    return %c0_i32, %c0_i32_0 : i32, i32
  }
  func.func @transform_2(%arg0: i32, %arg1: i32) -> (i32, i32) {
    %c0_i32 = arith.constant 0 : i32
    %c0_i32_0 = arith.constant 0 : i32
    %c0_i32_1 = arith.constant 0 : i32
    return %c0_i32, %c0_i32_0 : i32, i32
  }
  func.func @transform_3(%arg0: i32, %arg1: i32) -> (i32, i32) {
    %c0_i32 = arith.constant 0 : i32
    %c0_i32_0 = arith.constant 0 : i32
    %c0_i32_1 = arith.constant 0 : i32
    return %c0_i32, %c0_i32_0 : i32, i32
  }
  func.func @transform_4(%arg0: i32, %arg1: i32) -> (i32, i32) {
    %c0_i32 = arith.constant 0 : i32
    %c0_i32_0 = arith.constant 0 : i32
    %c0_i32_1 = arith.constant 0 : i32
    return %c0_i32, %c0_i32_0 : i32, i32
  }
  func.func @transform_5(%arg0: i32, %arg1: i32) -> (i32, i32) {
    %c0_i32 = arith.constant 0 : i32
    %c0_i32_0 = arith.constant 0 : i32
    %c0_i32_1 = arith.constant 0 : i32
    return %c0_i32, %c0_i32_0 : i32, i32
  }
  func.func @transform_6(%arg0: i32, %arg1: i32) -> (i32, i32) {
    %c0_i32 = arith.constant 0 : i32
    %c0_i32_0 = arith.constant 0 : i32
    %c0_i32_1 = arith.constant 0 : i32
    return %c0_i32, %c0_i32_0 : i32, i32
  }
  func.func @transform_7(%arg0: i32, %arg1: i32) -> (i32, i32, i32) {
    %c0_i32 = arith.constant 0 : i32
    %c0_i32_0 = arith.constant 0 : i32
    return %arg0, %c0_i32, %arg1 : i32, i32, i32
  }
}

</mosaic_0001>

<llo_original>
// kernel: tpu_custom_call.1
$region0: #{tpu_custom_call.1}
  #allocation0 [shape = 'u32[]', space=smem, size = 0x4, offset = 0x4, fixed_abs, tag = 'smem constant byte address 0x4 - core index']
  #allocation1 [shape = 'u32[144,128]{1,0:T(1,128)}', space=vmem, size = 0x12000, scoped, tag = 'internal scratch']
  %s0 = inlined_call_operand.vmem [shape: f32[2,12,2048], index: 0, kind: input, shape index: {}]
  %s1 = inlined_call_operand.vmem [shape: bf16[32,12], index: 1, kind: input, shape index: {}]
  %s2 = inlined_call_operand.vmem [shape: f32[32,1], index: 2, kind: input, shape index: {}]
  %s3 = inlined_call_operand.vmem [shape: bf16[16,32], index: 3, kind: input, shape index: {}]
  %s4 = inlined_call_operand.vmem [shape: f32[16,1], index: 4, kind: input, shape index: {}]
  %s5 = inlined_call_operand.vmem [shape: bf16[4,16], index: 5, kind: input, shape index: {}]
  %s6 = inlined_call_operand.vmem [shape: f32[4,1], index: 6, kind: input, shape index: {}]
  %s7 = inlined_call_operand.hbm [shape: f32[2,4,2048], index: 7, kind: output, shape index: {}]
  %s8 = sld [smem:[#allocation0]]
  $region61: #{tpu_custom_call.1} parent=0
    _
  %s10 = ssub.s32 1, %s8
  %s11 = scalar_select 0, %s10, %s8
  $region1: #{tpu_custom_call.1} parent=0
    #allocation2 [shape = 'u8[65536]{0}', space=vmem, size = 0x10000, scoped, tag = 'output window, operand 0']
    #allocation3 [shape = 's32[2]{0}', space=sflag, size = 0x8, scoped, tag = 'scoped memory for tpu_custom_call.1']
    %12 = vsyncpa [#allocation3], 0
    %s13 = scalar_lea.sflag [#allocation3], 1
    %14 = vsyncpa %s13, 0
    loop: start=0, step=1, limit=4
    $region2: #{tpu_custom_call.1} parent=1 // loop_pre_header
      _
    $region3: #{tpu_custom_call.1} parent=1 // loop_header
      %s16 = sphi 0, %s20
      %p17 = scmp.ge.s32.totalorder %s16, 4
      %s23 = sphi 0, %s35
      %s24 = sphi 0, %s31
      %s25 = sphi 0, %s23
      %s26 = sphi 0, %s24
      %s27 = sphi 0, %s25
      %s28 = sphi 0, %s26
      %s40 = sphi 0, %s42
      %s43 = sphi 0, %s40
      %s44 = sphi 0, %s43
      %s60 = sphi 0, %s44
      %s64 = sphi 0, %s64
      %s66 = sphi 0, %s64
      %s67 = sphi 0, %s66
      %s81 = sphi 0, %s67
      %s85 = sphi 0, %s85
      %s87 = sphi 0, %s85
      %s88 = sphi 0, %s87
      %s102 = sphi 0, %s88
      %s106 = sphi 0, %s106
      %s108 = sphi 0, %s106
      %s109 = sphi 0, %s108
      %s123 = sphi 0, %s109
      %s127 = sphi 0, %s127
      %s129 = sphi 0, %s127
      %s130 = sphi 0, %s129
      %s144 = sphi 0, %s130
      %s148 = sphi 0, %s148
      %s150 = sphi 0, %s148
      %s151 = sphi 0, %s150
      %s165 = sphi 0, %s151
      %s169 = sphi 0, %s169
      %s171 = sphi 0, %s169
      %s172 = sphi 0, %s171
      %s186 = sphi 0, %s172
      %s194 = sphi 0, %s196
      %s197 = sphi 0, %s194
      %s198 = sphi 0, %s197
      %s214 = sphi 0, %s198
    $region4: #{tpu_custom_call.1} parent=1 // loop_header_branch
      %19 = sbr.rel (%p17) target = $region8
    $region5: #{tpu_custom_call.1} parent=1 // loop_body
      %s21 = ssub.s32 %s16, 1
      %s22 = ssub.s32 %s16, 2
      %s29 = sadd.s32 1, %s24
      %p30 = scmp.ge.s32.totalorder %s29, 1
      %s31 = scalar_select %p30, 0, %s29
      %s32 = sadd.s32 1, %s23
      %s33 = scalar_select %p30, %s32, %s23
      %p34 = scmp.ge.s32.totalorder %s33, 2
      %s35 = scalar_select %p34, 0, %s33
      %s36 = ssub.s32 %s23, %s35
      %s37 = ssub.s32 %s24, %s31
      %s38 = sor.u32 %s36, %s37
      %p39 = scmp.eq.s32.totalorder %s38, 0
      %s41 = sadd.s32 %s40, 1
      %s42 = scalar_select %p39, %s40, %s41
      %p45 = pneg %p39
      %p46 = scmp.eq.s32.totalorder %s16, 1
      %p47 = por %p45, %p46
      %p48 = scmp.ne.s32.totalorder %s40, %s43
      %p49 = scmp.eq.s32.totalorder %s16, 0
      %p50 = por %p48, %p49
      %p51 = scmp.ne.s32.totalorder %s40, %s43
      %p52 = scmp.eq.s32.totalorder %s21, 1
      %p53 = por %p51, %p52
      %p54 = scmp.ne.s32.totalorder %s43, %s44
      %p55 = scmp.eq.s32.totalorder %s21, 0
      %p56 = por %p54, %p55
      %p57 = scmp.ne.s32.totalorder %s43, %s44
      %p58 = scmp.eq.s32.totalorder %s22, 1
      %p59 = por %p57, %p58
      %p61 = scmp.ne.s32.totalorder %s44, %s60
      %p62 = scmp.eq.s32.totalorder %s22, 0
      %p63 = por %p61, %p62
      %s65 = sadd.s32 %s64, 1
      %p68 = scmp.eq.s32.totalorder %s16, 1
      %p69 = scmp.ne.s32.totalorder %s64, %s66
      %p70 = scmp.eq.s32.totalorder %s16, 0
      %p71 = por %p69, %p70
      %p72 = scmp.ne.s32.totalorder %s64, %s66
      %p73 = scmp.eq.s32.totalorder %s21, 1
      %p74 = por %p72, %p73
      %p75 = scmp.ne.s32.totalorder %s66, %s67
      %p76 = scmp.eq.s32.totalorder %s21, 0
      %p77 = por %p75, %p76
      %p78 = scmp.ne.s32.totalorder %s66, %s67
      %p79 = scmp.eq.s32.totalorder %s22, 1
      %p80 = por %p78, %p79
      %p82 = scmp.ne.s32.totalorder %s67, %s81
      %p83 = scmp.eq.s32.totalorder %s22, 0
      %p84 = por %p82, %p83
      %s86 = sadd.s32 %s85, 1
      %p89 = scmp.eq.s32.totalorder %s16, 1
      %p90 = scmp.ne.s32.totalorder %s85, %s87
      %p91 = scmp.eq.s32.totalorder %s16, 0
      %p92 = por %p90, %p91
      %p93 = scmp.ne.s32.totalorder %s85, %s87
      %p94 = scmp.eq.s32.totalorder %s21, 1
      %p95 = por %p93, %p94
      %p96 = scmp.ne.s32.totalorder %s87, %s88
      %p97 = scmp.eq.s32.totalorder %s21, 0
      %p98 = por %p96, %p97
      %p99 = scmp.ne.s32.totalorder %s87, %s88
      %p100 = scmp.eq.s32.totalorder %s22, 1
      %p101 = por %p99, %p100
      %p103 = scmp.ne.s32.totalorder %s88, %s102
      %p104 = scmp.eq.s32.totalorder %s22, 0
      %p105 = por %p103, %p104
      %s107 = sadd.s32 %s106, 1
      %p110 = scmp.eq.s32.totalorder %s16, 1
      %p111 = scmp.ne.s32.totalorder %s106, %s108
      %p112 = scmp.eq.s32.totalorder %s16, 0
      %p113 = por %p111, %p112
      %p114 = scmp.ne.s32.totalorder %s106, %s108
      %p115 = scmp.eq.s32.totalorder %s21, 1
      %p116 = por %p114, %p115
      %p117 = scmp.ne.s32.totalorder %s108, %s109
      %p118 = scmp.eq.s32.totalorder %s21, 0
      %p119 = por %p117, %p118
      %p120 = scmp.ne.s32.totalorder %s108, %s109
      %p121 = scmp.eq.s32.totalorder %s22, 1
      %p122 = por %p120, %p121
      %p124 = scmp.ne.s32.totalorder %s109, %s123
      %p125 = scmp.eq.s32.totalorder %s22, 0
      %p126 = por %p124, %p125
      %s128 = sadd.s32 %s127, 1
      %p131 = scmp.eq.s32.totalorder %s16, 1
      %p132 = scmp.ne.s32.totalorder %s127, %s129
      %p133 = scmp.eq.s32.totalorder %s16, 0
      %p134 = por %p132, %p133
      %p135 = scmp.ne.s32.totalorder %s127, %s129
      %p136 = scmp.eq.s32.totalorder %s21, 1
      %p137 = por %p135, %p136
      %p138 = scmp.ne.s32.totalorder %s129, %s130
      %p139 = scmp.eq.s32.totalorder %s21, 0
      %p140 = por %p138, %p139
      %p141 = scmp.ne.s32.totalorder %s129, %s130
      %p142 = scmp.eq.s32.totalorder %s22, 1
      %p143 = por %p141, %p142
      %p145 = scmp.ne.s32.totalorder %s130, %s144
      %p146 = scmp.eq.s32.totalorder %s22, 0
      %p147 = por %p145, %p146
      %s149 = sadd.s32 %s148, 1
      %p152 = scmp.eq.s32.totalorder %s16, 1
      %p153 = scmp.ne.s32.totalorder %s148, %s150
      %p154 = scmp.eq.s32.totalorder %s16, 0
      %p155 = por %p153, %p154
      %p156 = scmp.ne.s32.totalorder %s148, %s150
      %p157 = scmp.eq.s32.totalorder %s21, 1
      %p158 = por %p156, %p157
      %p159 = scmp.ne.s32.totalorder %s150, %s151
      %p160 = scmp.eq.s32.totalorder %s21, 0
      %p161 = por %p159, %p160
      %p162 = scmp.ne.s32.totalorder %s150, %s151
      %p163 = scmp.eq.s32.totalorder %s22, 1
      %p164 = por %p162, %p163
      %p166 = scmp.ne.s32.totalorder %s151, %s165
      %p167 = scmp.eq.s32.totalorder %s22, 0
      %p168 = por %p166, %p167
      %s170 = sadd.s32 %s169, 1
      %p173 = scmp.eq.s32.totalorder %s16, 1
      %p174 = scmp.ne.s32.totalorder %s169, %s171
      %p175 = scmp.eq.s32.totalorder %s16, 0
      %p176 = por %p174, %p175
      %p177 = scmp.ne.s32.totalorder %s169, %s171
      %p178 = scmp.eq.s32.totalorder %s21, 1
      %p179 = por %p177, %p178
      %p180 = scmp.ne.s32.totalorder %s171, %s172
      %p181 = scmp.eq.s32.totalorder %s21, 0
      %p182 = por %p180, %p181
      %p183 = scmp.ne.s32.totalorder %s171, %s172
      %p184 = scmp.eq.s32.totalorder %s22, 1
      %p185 = por %p183, %p184
      %p187 = scmp.ne.s32.totalorder %s172, %s186
      %p188 = scmp.eq.s32.totalorder %s22, 0
      %p189 = por %p187, %p188
      %s190 = ssub.s32 %s23, %s35
      %s191 = ssub.s32 %s24, %s31
      %s192 = sor.u32 %s190, %s191
      %p193 = scmp.eq.s32.totalorder %s192, 0
      %s195 = sadd.s32 %s194, 1
      %s196 = scalar_select %p193, %s194, %s195
      %p199 = pneg %p193
      %p200 = scmp.eq.s32.totalorder %s16, 1
      %p201 = por %p199, %p200
      %p202 = scmp.ne.s32.totalorder %s194, %s197
      %p203 = scmp.eq.s32.totalorder %s16, 0
      %p204 = por %p202, %p203
      %p205 = scmp.ne.s32.totalorder %s194, %s197
      %p206 = scmp.eq.s32.totalorder %s21, 1
      %p207 = por %p205, %p206
      %p208 = scmp.ne.s32.totalorder %s197, %s198
      %p209 = scmp.eq.s32.totalorder %s21, 0
      %p210 = por %p208, %p209
      %p211 = scmp.ne.s32.totalorder %s197, %s198
      %p212 = scmp.eq.s32.totalorder %s22, 1
      %p213 = por %p211, %p212
      %p215 = scmp.ne.s32.totalorder %s198, %s214
      %p216 = scmp.eq.s32.totalorder %s22, 0
      %p217 = por %p215, %p216
      %p218 = scmp.le.s32.totalorder 1, %s16
      %p219 = scmp.lt.s32.totalorder %s16, 3
      %p220 = pnand %p218, %p219
      %p221 = pneg %p220
      // Predicated region
      $region9: #{tpu_custom_call.1} parent=5 // pred_check
        _
      $region10: #{tpu_custom_call.1} parent=5 // pred_check_branch
        %223 = sbr.rel (%p220) target = $region12
      $region11: #{tpu_custom_call.1} parent=5 // pred_region
        %s224 = ssub.s32 %s16, 1
        // Predicated region
        $region13: #{tpu_custom_call.1} parent=11 // pred_check
          %p225 = pneg %p77
        $region14: #{tpu_custom_call.1} parent=11 // pred_check_branch
          %227 = sbr.rel (%p225) target = $region16
        $region15: #{tpu_custom_call.1} parent=11 // pred_region
          _
        $region16: #{tpu_custom_call.1} parent=11 // pred_fallthru
          _
        // Predicated region
        $region17: #{tpu_custom_call.1} parent=11 // pred_check
          %p228 = pneg %p98
        $region18: #{tpu_custom_call.1} parent=11 // pred_check_branch
          %230 = sbr.rel (%p228) target = $region20
        $region19: #{tpu_custom_call.1} parent=11 // pred_region
          _
        $region20: #{tpu_custom_call.1} parent=11 // pred_fallthru
          _
        // Predicated region
        $region21: #{tpu_custom_call.1} parent=11 // pred_check
          %p231 = pneg %p119
        $region22: #{tpu_custom_call.1} parent=11 // pred_check_branch
          %233 = sbr.rel (%p231) target = $region24
        $region23: #{tpu_custom_call.1} parent=11 // pred_region
          _
        $region24: #{tpu_custom_call.1} parent=11 // pred_fallthru
          _
        // Predicated region
        $region25: #{tpu_custom_call.1} parent=11 // pred_check
          %p234 = pneg %p140
        $region26: #{tpu_custom_call.1} parent=11 // pred_check_branch
          %236 = sbr.rel (%p234) target = $region28
        $region27: #{tpu_custom_call.1} parent=11 // pred_region
          _
        $region28: #{tpu_custom_call.1} parent=11 // pred_fallthru
          _
        // Predicated region
        $region29: #{tpu_custom_call.1} parent=11 // pred_check
          %p237 = pneg %p161
        $region30: #{tpu_custom_call.1} parent=11 // pred_check_branch
          %239 = sbr.rel (%p237) target = $region32
        $region31: #{tpu_custom_call.1} parent=11 // pred_region
          _
        $region32: #{tpu_custom_call.1} parent=11 // pred_fallthru
          _
        // Predicated region
        $region33: #{tpu_custom_call.1} parent=11 // pred_check
          %p240 = pneg %p182
        $region34: #{tpu_custom_call.1} parent=11 // pred_check_branch
          %242 = sbr.rel (%p240) target = $region36
        $region35: #{tpu_custom_call.1} parent=11 // pred_region
          _
        $region36: #{tpu_custom_call.1} parent=11 // pred_fallthru
          _
      $region12: #{tpu_custom_call.1} parent=5 // pred_fallthru
        _
      %p243 = scmp.lt.s32.totalorder %s16, 2
      // Predicated region
      $region37: #{tpu_custom_call.1} parent=5 // pred_check
        %p244 = pneg %p243
      $region38: #{tpu_custom_call.1} parent=5 // pred_check_branch
        %246 = sbr.rel (%p244) target = $region40
      $region39: #{tpu_custom_call.1} parent=5 // pred_region
        // Predicated region
        $region41: #{tpu_custom_call.1} parent=39 // pred_check
          %p247 = pneg %p50
        $region42: #{tpu_custom_call.1} parent=39 // pred_check_branch
          %249 = sbr.rel (%p247) target = $region44
        $region43: #{tpu_custom_call.1} parent=39 // pred_region
          %s250 = smul.u32 16, %s24
          %p251 = scmp.lt.s32.totalorder %s23, 1
          %s252 = scalar_select %p251, %s23, 1
          %p253 = scmp.lt.s32.totalorder %s250, 15
          %s254 = scalar_select %p253, %s250, 15
          %s255 = smul.addr %s252, 32
          %s256 = sadd.s32 %s254, %s255
          %s257 = smul.addr %s256, 8
          %s258 = scalar_lea.vmem %s0, %s257
          %s259 = smul.u32 16, %s24
        $region44: #{tpu_custom_call.1} parent=39 // pred_fallthru
          _
      $region40: #{tpu_custom_call.1} parent=5 // pred_fallthru
        _
      %p260 = scmp.le.s32.totalorder 1, %s16
      %p261 = scmp.lt.s32.totalorder %s16, 3
      %p262 = pnand %p260, %p261
      %p263 = pneg %p262
      // Predicated region
      $region45: #{tpu_custom_call.1} parent=5 // pred_check
        _
      $region46: #{tpu_custom_call.1} parent=5 // pred_check_branch
        %265 = sbr.rel (%p262) target = $region48
      $region47: #{tpu_custom_call.1} parent=5 // pred_region
        %s266 = ssub.s32 %s16, 1
        %s267 = smul.u32 16, %s26
        %p268 = scmp.lt.s32.totalorder %s25, 1
        %s269 = scalar_select %p268, %s25, 1
        %p270 = scmp.lt.s32.totalorder %s267, 15
        %s271 = scalar_select %p270, %s267, 15
        %s272 = smul.addr %s269, 32
        %s273 = sadd.s32 %s271, %s272
        %s274 = smul.addr %s273, 8
        %s275 = scalar_lea.vmem %s0, %s274
        %p276 = pneg %p56
        %p277 = pneg %p53
        %p278 = pneg %p77
        %p279 = pneg %p74
        %p280 = pneg %p98
        %p281 = pneg %p95
        %p282 = pneg %p119
        %p283 = pneg %p116
        %p284 = pneg %p140
        %p285 = pneg %p137
        %p286 = pneg %p161
        %p287 = pneg %p158
        %p288 = pneg %p182
        %p289 = pneg %p179
        %p290 = pneg %p210
        %p291 = pneg %p207
        %s292 = sand.u32 %s197, 1
        %s293 = scalar_lea.sflag [#allocation3], %s292
        %s294 = sand.u32 %s197, 1
        %s295 = smul.addr %s294, 64
        %s296 = scalar_lea.vmem [#allocation2], %s295
        %s297 = smul.u32 16, %s26
        %p298 = scmp.lt.s32.totalorder %s25, 1
        %s299 = scalar_select %p298, %s25, 1
        %p300 = scmp.lt.s32.totalorder %s297, 15
        %s301 = scalar_select %p300, %s297, 15
        %s302 = smul.addr %s299, 32
        %s303 = sadd.s32 %s301, %s302
        %s304 = smul.addr %s303, 8
        %s305 = scalar_lea.vmem %s0, %s304
        %s306 = smul.u32 16, %s26
        %s307 = smul.u32 16, %s26
        %v309 = vld [vmem:[%s305] sm:$0xff]
        %v310 = vld [vmem:[%s305 + $0x8] sm:$0xff]
        %v311 = vld [vmem:[%s305 + $0x10] sm:$0xff]
        %v312 = vld [vmem:[%s305 + $0x18] sm:$0xff]
        %v313 = vld [vmem:[%s305 + $0x20] sm:$0xff]
        %v314 = vld [vmem:[%s305 + $0x28] sm:$0xff]
        %v315 = vld [vmem:[%s305 + $0x30] sm:$0xff]
        %v316 = vld [vmem:[%s305 + $0x38] sm:$0xff]
        %v317 = vld [vmem:[%s305 + $0x40] sm:$0xff]
        %v318 = vld [vmem:[%s305 + $0x48] sm:$0xff]
        %v319 = vld [vmem:[%s305 + $0x50] sm:$0xff]
        %v320 = vld [vmem:[%s305 + $0x58] sm:$0xff]
        %v321 = vld [vmem:[%s305 + $0x60] sm:$0xff]
        %v322 = vld [vmem:[%s305 + $0x68] sm:$0xff]
        %v323 = vld [vmem:[%s305 + $0x70] sm:$0xff]
        %v324 = vld [vmem:[%s305 + $0x78] sm:$0xff]
        %v325 = vld [vmem:[%s305 + $0x80] sm:$0xf]
        %v326 = vld [vmem:[%s305 + $0x88] sm:$0xf]
        %v327 = vld [vmem:[%s305 + $0x90] sm:$0xf]
        %v328 = vld [vmem:[%s305 + $0x98] sm:$0xf]
        %v329 = vld [vmem:[%s305 + $0xa0] sm:$0xf]
        %v330 = vld [vmem:[%s305 + $0xa8] sm:$0xf]
        %v331 = vld [vmem:[%s305 + $0xb0] sm:$0xf]
        %v332 = vld [vmem:[%s305 + $0xb8] sm:$0xf]
        %v333 = vld [vmem:[%s305 + $0xc0] sm:$0xf]
        %v334 = vld [vmem:[%s305 + $0xc8] sm:$0xf]
        %v335 = vld [vmem:[%s305 + $0xd0] sm:$0xf]
        %v336 = vld [vmem:[%s305 + $0xd8] sm:$0xf]
        %v337 = vld [vmem:[%s305 + $0xe0] sm:$0xf]
        %v338 = vld [vmem:[%s305 + $0xe8] sm:$0xf]
        %v339 = vld [vmem:[%s305 + $0xf0] sm:$0xf]
        %v340 = vld [vmem:[%s305 + $0xf8] sm:$0xf]
        %v341 = vld [vmem:[%s1] sm:$0xf]
        %v342 = vld [vmem:[%s1 + $0x4] sm:$0xf]
        %v343 = vld [vmem:[%s1 + $0x8] sm:$0xf]
        %v344 = vld [vmem:[%s1 + $0xc] sm:$0xf]
        %v345 = vld [vmem:[%s2] sm:$0xff]
        %v346 = vld [vmem:[%s2 + $0x8] sm:$0xff]
        %v347 = vld [vmem:[%s2 + $0x10] sm:$0xff]
        %v348 = vld [vmem:[%s2 + $0x18] sm:$0xff]
        %v349 = vpack.c.bf16 %v325, %v309
        %v350 = vpack.c.bf16 %v326, %v310
        %v351 = vpack.c.bf16 %v327, %v311
        %v352 = vpack.c.bf16 %v328, %v312
        %v353 = vpack.c.bf16 %v329, %v313
        %v354 = vpack.c.bf16 %v330, %v314
        %v355 = vpack.c.bf16 %v331, %v315
        %v356 = vpack.c.bf16 %v332, %v316
        %v357 = vpack.c.bf16 %v333, %v317
        %v358 = vpack.c.bf16 %v334, %v318
        %v359 = vpack.c.bf16 %v335, %v319
        %v360 = vpack.c.bf16 %v336, %v320
        %v361 = vpack.c.bf16 %v337, %v321
        %v362 = vpack.c.bf16 %v338, %v322
        %v363 = vpack.c.bf16 %v339, %v323
        %v364 = vpack.c.bf16 %v340, %v324
        %366 = vset.pattern.permute.xlu0 0
        %367 = vperm.xlu0 %366, %v345
        %v368 = vpop.permute.xlu0 %367
        %371 = vset.pattern.permute.xlu0 0
        %372 = vperm.xlu0 %371, %v346
        %v373 = vpop.permute.xlu0 %372
        %376 = vset.pattern.permute.xlu0 0
        %377 = vperm.xlu0 %376, %v347
        %v378 = vpop.permute.xlu0 %377
        %381 = vset.pattern.permute.xlu0 0
        %382 = vperm.xlu0 %381, %v348
        %v383 = vpop.permute.xlu0 %382
        %v389 = vunpack.c.l.b16 %v341
        %v390 = vunpack.c.l.b16 %v342
        %v391 = vunpack.c.l.b16 %v343
        %v392 = vunpack.c.l.b16 %v344
        %v393 = vpack.c.b16 %v390, %v389
        %v394 = vpack.c.b16 %v392, %v391
        %vm395 = vcmask 97280
        %v397 = vsel %vm395, %v393, 0
        %v400 = vsel %vm395, %v394, 0
        %vm402 = vcmask 1045504
        %v404 = vsel %vm402, %v349, 0
        %v407 = vsel %vm402, %v350, 0
        %v410 = vsel %vm402, %v351, 0
        %v413 = vsel %vm402, %v352, 0
        %v416 = vsel %vm402, %v353, 0
        %v419 = vsel %vm402, %v354, 0
        %v422 = vsel %vm402, %v355, 0
        %v425 = vsel %vm402, %v356, 0
        %v428 = vsel %vm402, %v357, 0
        %v431 = vsel %vm402, %v358, 0
        %v434 = vsel %vm402, %v359, 0
        %v437 = vsel %vm402, %v360, 0
        %v440 = vsel %vm402, %v361, 0
        %v443 = vsel %vm402, %v362, 0
        %v446 = vsel %vm402, %v363, 0
        %v449 = vsel %vm402, %v364, 0
        %451 = vmatprep.subr.bf16.mxu0 0
        %452 = vmatpush1.bf16.msra.mxu0 0
        %453 = vmatprep.subr.bf16.mxu0 0
        %454 = vmatpush1.bf16.msra.mxu0 0
        %455 = vmatprep.subr.bf16.mxu0 0
        %456 = vmatpush1.bf16.msra.mxu0 0
        %457 = vmatprep.subr.bf16.mxu0 0
        %458 = vmatpush1.bf16.msra.mxu0 0
        %459 = vmatprep.subr.bf16.mxu0 0
        %460 = vmatpush1.bf16.msra.mxu0 0
        %461 = vmatprep.subr.bf16.mxu0 0
        %462 = vmatpush1.bf16.msra.mxu0 0
        %463 = vmatprep.subr.bf16.mxu0 0
        %464 = vmatpush1.bf16.msra.mxu0 0
        %465 = vmatprep.subr.bf16.mxu0 %v407
        %466 = vmatpush1.bf16.msra.mxu0 %v404
        %467 = vmatprep.subr.bf16.mxu0 0
        %468 = vmatpush2.bf16.msra.mxu0 0
        %469 = vmatprep.subr.bf16.mxu0 0
        %470 = vmatpush2.bf16.msra.mxu0 0
        %471 = vmatprep.subr.bf16.mxu0 0
        %472 = vmatpush2.bf16.msra.mxu0 0
        %473 = vmatprep.subr.bf16.mxu0 0
        %474 = vmatpush2.bf16.msra.mxu0 0
        %475 = vmatprep.subr.bf16.mxu0 0
        %476 = vmatpush2.bf16.msra.mxu0 0
        %477 = vmatprep.subr.bf16.mxu0 0
        %478 = vmatpush2.bf16.msra.mxu0 0
        %479 = vmatprep.subr.bf16.mxu0 0
        %480 = vmatpush2.bf16.msra.mxu0 0
        %481 = vmatprep.subr.bf16.mxu0 0
        %482 = vmatpush2.bf16.msra.mxu0 0
        %483 = vmatprep.mubr.bf16.mxu0 0
        %484 = vmatmul.mubr.bf16.gmra.mxu0 %v397
        %v485 = vpop.f32.mrf.mxu0
        %v486 = vadd.f32 %v368, %v485
        %v487 = vpop.f32.mrf.mxu0
        %v488 = vadd.f32 %v368, %v487
        %v489 = vpop.f32.mrf.mxu0
        %v490 = vadd.f32 %v373, %v489
        %v491 = vpop.f32.mrf.mxu0
        %v492 = vadd.f32 %v373, %v491
        %493 = vmatprep.mubr.bf16.mxu0 0
        %494 = vmatmul.mubr.bf16.gmra.mxu0 %v400
        %v495 = vpop.f32.mrf.mxu0
        %v496 = vadd.f32 %v378, %v495
        %v497 = vpop.f32.mrf.mxu0
        %v498 = vadd.f32 %v378, %v497
        %v499 = vpop.f32.mrf.mxu0
        %v500 = vadd.f32 %v383, %v499
        %v501 = vpop.f32.mrf.mxu0
        %v502 = vadd.f32 %v383, %v501
        %503 = vdwg.mxu0
        %504 = vmatprep.subr.bf16.mxu0 0
        %505 = vmatpush1.bf16.msra.mxu0 0
        %506 = vmatprep.subr.bf16.mxu0 0
        %507 = vmatpush1.bf16.msra.mxu0 0
        %508 = vmatprep.subr.bf16.mxu0 0
        %509 = vmatpush1.bf16.msra.mxu0 0
        %510 = vmatprep.subr.bf16.mxu0 0
        %511 = vmatpush1.bf16.msra.mxu0 0
        %512 = vmatprep.subr.bf16.mxu0 0
        %513 = vmatpush1.bf16.msra.mxu0 0
        %514 = vmatprep.subr.bf16.mxu0 0
        %515 = vmatpush1.bf16.msra.mxu0 0
        %516 = vmatprep.subr.bf16.mxu0 0
        %517 = vmatpush1.bf16.msra.mxu0 0
        %518 = vmatprep.subr.bf16.mxu0 %v413
        %519 = vmatpush1.bf16.msra.mxu0 %v410
        %520 = vmatprep.subr.bf16.mxu0 0
        %521 = vmatpush2.bf16.msra.mxu0 0
        %522 = vmatprep.subr.bf16.mxu0 0
        %523 = vmatpush2.bf16.msra.mxu0 0
        %524 = vmatprep.subr.bf16.mxu0 0
        %525 = vmatpush2.bf16.msra.mxu0 0
        %526 = vmatprep.subr.bf16.mxu0 0
        %527 = vmatpush2.bf16.msra.mxu0 0
        %528 = vmatprep.subr.bf16.mxu0 0
        %529 = vmatpush2.bf16.msra.mxu0 0
        %530 = vmatprep.subr.bf16.mxu0 0
        %531 = vmatpush2.bf16.msra.mxu0 0
        %532 = vmatprep.subr.bf16.mxu0 0
        %533 = vmatpush2.bf16.msra.mxu0 0
        %534 = vmatprep.subr.bf16.mxu0 0
        %535 = vmatpush2.bf16.msra.mxu0 0
        %536 = vmatprep.mubr.bf16.mxu0 0
        %537 = vmatmul.mubr.bf16.gmra.mxu0 %v397
        %v538 = vpop.f32.mrf.mxu0
        %v539 = vadd.f32 %v368, %v538
        %v540 = vpop.f32.mrf.mxu0
        %v541 = vadd.f32 %v368, %v540
        %v542 = vpop.f32.mrf.mxu0
        %v543 = vadd.f32 %v373, %v542
        %v544 = vpop.f32.mrf.mxu0
        %v545 = vadd.f32 %v373, %v544
        %546 = vmatprep.mubr.bf16.mxu0 0
        %547 = vmatmul.mubr.bf16.gmra.mxu0 %v400
        %v548 = vpop.f32.mrf.mxu0
        %v549 = vadd.f32 %v378, %v548
        %v550 = vpop.f32.mrf.mxu0
        %v551 = vadd.f32 %v378, %v550
        %v552 = vpop.f32.mrf.mxu0
        %v553 = vadd.f32 %v383, %v552
        %v554 = vpop.f32.mrf.mxu0
        %v555 = vadd.f32 %v383, %v554
        %556 = vdwg.mxu0
        %557 = vmatprep.subr.bf16.mxu0 0
        %558 = vmatpush1.bf16.msra.mxu0 0
        %559 = vmatprep.subr.bf16.mxu0 0
        %560 = vmatpush1.bf16.msra.mxu0 0
        %561 = vmatprep.subr.bf16.mxu0 0
        %562 = vmatpush1.bf16.msra.mxu0 0
        %563 = vmatprep.subr.bf16.mxu0 0
        %564 = vmatpush1.bf16.msra.mxu0 0
        %565 = vmatprep.subr.bf16.mxu0 0
        %566 = vmatpush1.bf16.msra.mxu0 0
        %567 = vmatprep.subr.bf16.mxu0 0
        %568 = vmatpush1.bf16.msra.mxu0 0
        %569 = vmatprep.subr.bf16.mxu0 0
        %570 = vmatpush1.bf16.msra.mxu0 0
        %571 = vmatprep.subr.bf16.mxu0 %v419
        %572 = vmatpush1.bf16.msra.mxu0 %v416
        %573 = vmatprep.subr.bf16.mxu0 0
        %574 = vmatpush2.bf16.msra.mxu0 0
        %575 = vmatprep.subr.bf16.mxu0 0
        %576 = vmatpush2.bf16.msra.mxu0 0
        %577 = vmatprep.subr.bf16.mxu0 0
        %578 = vmatpush2.bf16.msra.mxu0 0
        %579 = vmatprep.subr.bf16.mxu0 0
        %580 = vmatpush2.bf16.msra.mxu0 0
        %581 = vmatprep.subr.bf16.mxu0 0
        %582 = vmatpush2.bf16.msra.mxu0 0
        %583 = vmatprep.subr.bf16.mxu0 0
        %584 = vmatpush2.bf16.msra.mxu0 0
        %585 = vmatprep.subr.bf16.mxu0 0
        %586 = vmatpush2.bf16.msra.mxu0 0
        %587 = vmatprep.subr.bf16.mxu0 0
        %588 = vmatpush2.bf16.msra.mxu0 0
        %589 = vmatprep.mubr.bf16.mxu0 0
        %590 = vmatmul.mubr.bf16.gmra.mxu0 %v397
        %v591 = vpop.f32.mrf.mxu0
        %v592 = vadd.f32 %v368, %v591
        %v593 = vpop.f32.mrf.mxu0
        %v594 = vadd.f32 %v368, %v593
        %v595 = vpop.f32.mrf.mxu0
        %v596 = vadd.f32 %v373, %v595
        %v597 = vpop.f32.mrf.mxu0
        %v598 = vadd.f32 %v373, %v597
        %599 = vmatprep.mubr.bf16.mxu0 0
        %600 = vmatmul.mubr.bf16.gmra.mxu0 %v400
        %v601 = vpop.f32.mrf.mxu0
        %v602 = vadd.f32 %v378, %v601
        %v603 = vpop.f32.mrf.mxu0
        %v604 = vadd.f32 %v378, %v603
        %v605 = vpop.f32.mrf.mxu0
        %v606 = vadd.f32 %v383, %v605
        %v607 = vpop.f32.mrf.mxu0
        %v608 = vadd.f32 %v383, %v607
        %609 = vdwg.mxu0
        %610 = vmatprep.subr.bf16.mxu0 0
        %611 = vmatpush1.bf16.msra.mxu0 0
        %612 = vmatprep.subr.bf16.mxu0 0
        %613 = vmatpush1.bf16.msra.mxu0 0
        %614 = vmatprep.subr.bf16.mxu0 0
        %615 = vmatpush1.bf16.msra.mxu0 0
        %616 = vmatprep.subr.bf16.mxu0 0
        %617 = vmatpush1.bf16.msra.mxu0 0
        %618 = vmatprep.subr.bf16.mxu0 0
        %619 = vmatpush1.bf16.msra.mxu0 0
        %620 = vmatprep.subr.bf16.mxu0 0
        %621 = vmatpush1.bf16.msra.mxu0 0
        %622 = vmatprep.subr.bf16.mxu0 0
        %623 = vmatpush1.bf16.msra.mxu0 0
        %624 = vmatprep.subr.bf16.mxu0 %v425
        %625 = vmatpush1.bf16.msra.mxu0 %v422
        %626 = vmatprep.subr.bf16.mxu0 0
        %627 = vmatpush2.bf16.msra.mxu0 0
        %628 = vmatprep.subr.bf16.mxu0 0
        %629 = vmatpush2.bf16.msra.mxu0 0
        %630 = vmatprep.subr.bf16.mxu0 0
        %631 = vmatpush2.bf16.msra.mxu0 0
        %632 = vmatprep.subr.bf16.mxu0 0
        %633 = vmatpush2.bf16.msra.mxu0 0
        %634 = vmatprep.subr.bf16.mxu0 0
        %635 = vmatpush2.bf16.msra.mxu0 0
        %636 = vmatprep.subr.bf16.mxu0 0
        %637 = vmatpush2.bf16.msra.mxu0 0
        %638 = vmatprep.subr.bf16.mxu0 0
        %639 = vmatpush2.bf16.msra.mxu0 0
        %640 = vmatprep.subr.bf16.mxu0 0
        %641 = vmatpush2.bf16.msra.mxu0 0
        %642 = vmatprep.mubr.bf16.mxu0 0
        %643 = vmatmul.mubr.bf16.gmra.mxu0 %v397
        %v644 = vpop.f32.mrf.mxu0
        %v645 = vadd.f32 %v368, %v644
        %v646 = vpop.f32.mrf.mxu0
        %v647 = vadd.f32 %v368, %v646
        %v648 = vpop.f32.mrf.mxu0
        %v649 = vadd.f32 %v373, %v648
        %v650 = vpop.f32.mrf.mxu0
        %v651 = vadd.f32 %v373, %v650
        %652 = vmatprep.mubr.bf16.mxu0 0
        %653 = vmatmul.mubr.bf16.gmra.mxu0 %v400
        %v654 = vpop.f32.mrf.mxu0
        %v655 = vadd.f32 %v378, %v654
        %v656 = vpop.f32.mrf.mxu0
        %v657 = vadd.f32 %v378, %v656
        %v658 = vpop.f32.mrf.mxu0
        %v659 = vadd.f32 %v383, %v658
        %v660 = vpop.f32.mrf.mxu0
        %v661 = vadd.f32 %v383, %v660
        %662 = vdwg.mxu0
        %663 = vmatprep.subr.bf16.mxu0 0
        %664 = vmatpush1.bf16.msra.mxu0 0
        %665 = vmatprep.subr.bf16.mxu0 0
        %666 = vmatpush1.bf16.msra.mxu0 0
        %667 = vmatprep.subr.bf16.mxu0 0
        %668 = vmatpush1.bf16.msra.mxu0 0
        %669 = vmatprep.subr.bf16.mxu0 0
        %670 = vmatpush1.bf16.msra.mxu0 0
        %671 = vmatprep.subr.bf16.mxu0 0
        %672 = vmatpush1.bf16.msra.mxu0 0
        %673 = vmatprep.subr.bf16.mxu0 0
        %674 = vmatpush1.bf16.msra.mxu0 0
        %675 = vmatprep.subr.bf16.mxu0 0
        %676 = vmatpush1.bf16.msra.mxu0 0
        %677 = vmatprep.subr.bf16.mxu0 %v431
        %678 = vmatpush1.bf16.msra.mxu0 %v428
        %679 = vmatprep.subr.bf16.mxu0 0
        %680 = vmatpush2.bf16.msra.mxu0 0
        %681 = vmatprep.subr.bf16.mxu0 0
        %682 = vmatpush2.bf16.msra.mxu0 0
        %683 = vmatprep.subr.bf16.mxu0 0
        %684 = vmatpush2.bf16.msra.mxu0 0
        %685 = vmatprep.subr.bf16.mxu0 0
        %686 = vmatpush2.bf16.msra.mxu0 0
        %687 = vmatprep.subr.bf16.mxu0 0
        %688 = vmatpush2.bf16.msra.mxu0 0
        %689 = vmatprep.subr.bf16.mxu0 0
        %690 = vmatpush2.bf16.msra.mxu0 0
        %691 = vmatprep.subr.bf16.mxu0 0
        %692 = vmatpush2.bf16.msra.mxu0 0
        %693 = vmatprep.subr.bf16.mxu0 0
        %694 = vmatpush2.bf16.msra.mxu0 0
        %695 = vmatprep.mubr.bf16.mxu0 0
        %696 = vmatmul.mubr.bf16.gmra.mxu0 %v397
        %v697 = vpop.f32.mrf.mxu0
        %v698 = vadd.f32 %v368, %v697
        %v699 = vpop.f32.mrf.mxu0
        %v700 = vadd.f32 %v368, %v699
        %v701 = vpop.f32.mrf.mxu0
        %v702 = vadd.f32 %v373, %v701
        %v703 = vpop.f32.mrf.mxu0
        %v704 = vadd.f32 %v373, %v703
        %705 = vmatprep.mubr.bf16.mxu0 0
        %706 = vmatmul.mubr.bf16.gmra.mxu0 %v400
        %v707 = vpop.f32.mrf.mxu0
        %v708 = vadd.f32 %v378, %v707
        %v709 = vpop.f32.mrf.mxu0
        %v710 = vadd.f32 %v378, %v709
        %v711 = vpop.f32.mrf.mxu0
        %v712 = vadd.f32 %v383, %v711
        %v713 = vpop.f32.mrf.mxu0
        %v714 = vadd.f32 %v383, %v713
        %715 = vdwg.mxu0
        %716 = vmatprep.subr.bf16.mxu0 0
        %717 = vmatpush1.bf16.msra.mxu0 0
        %718 = vmatprep.subr.bf16.mxu0 0
        %719 = vmatpush1.bf16.msra.mxu0 0
        %720 = vmatprep.subr.bf16.mxu0 0
        %721 = vmatpush1.bf16.msra.mxu0 0
        %722 = vmatprep.subr.bf16.mxu0 0
        %723 = vmatpush1.bf16.msra.mxu0 0
        %724 = vmatprep.subr.bf16.mxu0 0
        %725 = vmatpush1.bf16.msra.mxu0 0
        %726 = vmatprep.subr.bf16.mxu0 0
        %727 = vmatpush1.bf16.msra.mxu0 0
        %728 = vmatprep.subr.bf16.mxu0 0
        %729 = vmatpush1.bf16.msra.mxu0 0
        %730 = vmatprep.subr.bf16.mxu0 %v437
        %731 = vmatpush1.bf16.msra.mxu0 %v434
        %732 = vmatprep.subr.bf16.mxu0 0
        %733 = vmatpush2.bf16.msra.mxu0 0
        %734 = vmatprep.subr.bf16.mxu0 0
        %735 = vmatpush2.bf16.msra.mxu0 0
        %736 = vmatprep.subr.bf16.mxu0 0
        %737 = vmatpush2.bf16.msra.mxu0 0
        %738 = vmatprep.subr.bf16.mxu0 0
        %739 = vmatpush2.bf16.msra.mxu0 0
        %740 = vmatprep.subr.bf16.mxu0 0
        %741 = vmatpush2.bf16.msra.mxu0 0
        %742 = vmatprep.subr.bf16.mxu0 0
        %743 = vmatpush2.bf16.msra.mxu0 0
        %744 = vmatprep.subr.bf16.mxu0 0
        %745 = vmatpush2.bf16.msra.mxu0 0
        %746 = vmatprep.subr.bf16.mxu0 0
        %747 = vmatpush2.bf16.msra.mxu0 0
        %748 = vmatprep.mubr.bf16.mxu0 0
        %749 = vmatmul.mubr.bf16.gmra.mxu0 %v397
        %v750 = vpop.f32.mrf.mxu0
        %v751 = vadd.f32 %v368, %v750
        %v752 = vpop.f32.mrf.mxu0
        %v753 = vadd.f32 %v368, %v752
        %v754 = vpop.f32.mrf.mxu0
        %v755 = vadd.f32 %v373, %v754
        %v756 = vpop.f32.mrf.mxu0
        %v757 = vadd.f32 %v373, %v756
        %758 = vmatprep.mubr.bf16.mxu0 0
        %759 = vmatmul.mubr.bf16.gmra.mxu0 %v400
        %v760 = vpop.f32.mrf.mxu0
        %v761 = vadd.f32 %v378, %v760
        %v762 = vpop.f32.mrf.mxu0
        %v763 = vadd.f32 %v378, %v762
        %v764 = vpop.f32.mrf.mxu0
        %v765 = vadd.f32 %v383, %v764
        %v766 = vpop.f32.mrf.mxu0
        %v767 = vadd.f32 %v383, %v766
        %768 = vdwg.mxu0
        %769 = vmatprep.subr.bf16.mxu0 0
        %770 = vmatpush1.bf16.msra.mxu0 0
        %771 = vmatprep.subr.bf16.mxu0 0
        %772 = vmatpush1.bf16.msra.mxu0 0
        %773 = vmatprep.subr.bf16.mxu0 0
        %774 = vmatpush1.bf16.msra.mxu0 0
        %775 = vmatprep.subr.bf16.mxu0 0
        %776 = vmatpush1.bf16.msra.mxu0 0
        %777 = vmatprep.subr.bf16.mxu0 0
        %778 = vmatpush1.bf16.msra.mxu0 0
        %779 = vmatprep.subr.bf16.mxu0 0
        %780 = vmatpush1.bf16.msra.mxu0 0
        %781 = vmatprep.subr.bf16.mxu0 0
        %782 = vmatpush1.bf16.msra.mxu0 0
        %783 = vmatprep.subr.bf16.mxu0 %v443
        %784 = vmatpush1.bf16.msra.mxu0 %v440
        %785 = vmatprep.subr.bf16.mxu0 0
        %786 = vmatpush2.bf16.msra.mxu0 0
        %787 = vmatprep.subr.bf16.mxu0 0
        %788 = vmatpush2.bf16.msra.mxu0 0
        %789 = vmatprep.subr.bf16.mxu0 0
        %790 = vmatpush2.bf16.msra.mxu0 0
        %791 = vmatprep.subr.bf16.mxu0 0
        %792 = vmatpush2.bf16.msra.mxu0 0
        %793 = vmatprep.subr.bf16.mxu0 0
        %794 = vmatpush2.bf16.msra.mxu0 0
        %795 = vmatprep.subr.bf16.mxu0 0
        %796 = vmatpush2.bf16.msra.mxu0 0
        %797 = vmatprep.subr.bf16.mxu0 0
        %798 = vmatpush2.bf16.msra.mxu0 0
        %799 = vmatprep.subr.bf16.mxu0 0
        %800 = vmatpush2.bf16.msra.mxu0 0
        %801 = vmatprep.mubr.bf16.mxu0 0
        %802 = vmatmul.mubr.bf16.gmra.mxu0 %v397
        %v803 = vpop.f32.mrf.mxu0
        %v804 = vadd.f32 %v368, %v803
        %v805 = vpop.f32.mrf.mxu0
        %v806 = vadd.f32 %v368, %v805
        %v807 = vpop.f32.mrf.mxu0
        %v808 = vadd.f32 %v373, %v807
        %v809 = vpop.f32.mrf.mxu0
        %v810 = vadd.f32 %v373, %v809
        %811 = vmatprep.mubr.bf16.mxu0 0
        %812 = vmatmul.mubr.bf16.gmra.mxu0 %v400
        %v813 = vpop.f32.mrf.mxu0
        %v814 = vadd.f32 %v378, %v813
        %v815 = vpop.f32.mrf.mxu0
        %v816 = vadd.f32 %v378, %v815
        %v817 = vpop.f32.mrf.mxu0
        %v818 = vadd.f32 %v383, %v817
        %v819 = vpop.f32.mrf.mxu0
        %v820 = vadd.f32 %v383, %v819
        %821 = vdwg.mxu0
        %822 = vmatprep.subr.bf16.mxu0 0
        %823 = vmatpush1.bf16.msra.mxu0 0
        %824 = vmatprep.subr.bf16.mxu0 0
        %825 = vmatpush1.bf16.msra.mxu0 0
        %826 = vmatprep.subr.bf16.mxu0 0
        %827 = vmatpush1.bf16.msra.mxu0 0
        %828 = vmatprep.subr.bf16.mxu0 0
        %829 = vmatpush1.bf16.msra.mxu0 0
        %830 = vmatprep.subr.bf16.mxu0 0
        %831 = vmatpush1.bf16.msra.mxu0 0
        %832 = vmatprep.subr.bf16.mxu0 0
        %833 = vmatpush1.bf16.msra.mxu0 0
        %834 = vmatprep.subr.bf16.mxu0 0
        %835 = vmatpush1.bf16.msra.mxu0 0
        %836 = vmatprep.subr.bf16.mxu0 %v449
        %837 = vmatpush1.bf16.msra.mxu0 %v446
        %838 = vmatprep.subr.bf16.mxu0 0
        %839 = vmatpush2.bf16.msra.mxu0 0
        %840 = vmatprep.subr.bf16.mxu0 0
        %841 = vmatpush2.bf16.msra.mxu0 0
        %842 = vmatprep.subr.bf16.mxu0 0
        %843 = vmatpush2.bf16.msra.mxu0 0
        %844 = vmatprep.subr.bf16.mxu0 0
        %845 = vmatpush2.bf16.msra.mxu0 0
        %846 = vmatprep.subr.bf16.mxu0 0
        %847 = vmatpush2.bf16.msra.mxu0 0
        %848 = vmatprep.subr.bf16.mxu0 0
        %849 = vmatpush2.bf16.msra.mxu0 0
        %850 = vmatprep.subr.bf16.mxu0 0
        %851 = vmatpush2.bf16.msra.mxu0 0
        %852 = vmatprep.subr.bf16.mxu0 0
        %853 = vmatpush2.bf16.msra.mxu0 0
        %854 = vmatprep.mubr.bf16.mxu0 0
        %855 = vmatmul.mubr.bf16.gmra.mxu0 %v397
        %v856 = vpop.f32.mrf.mxu0
        %v857 = vadd.f32 %v368, %v856
        %v858 = vpop.f32.mrf.mxu0
        %v859 = vadd.f32 %v368, %v858
        %v860 = vpop.f32.mrf.mxu0
        %v861 = vadd.f32 %v373, %v860
        %v862 = vpop.f32.mrf.mxu0
        %v863 = vadd.f32 %v373, %v862
        %864 = vmatprep.mubr.bf16.mxu0 0
        %865 = vmatmul.mubr.bf16.gmra.mxu0 %v400
        %v866 = vpop.f32.mrf.mxu0
        %v867 = vadd.f32 %v378, %v866
        %v868 = vpop.f32.mrf.mxu0
        %v869 = vadd.f32 %v378, %v868
        %v870 = vpop.f32.mrf.mxu0
        %v871 = vadd.f32 %v383, %v870
        %v872 = vpop.f32.mrf.mxu0
        %v873 = vadd.f32 %v383, %v872
        %874 = vdwg.mxu0
        %v875 = vtanh.pop %v486
        %v876 = vtanh.pop %v488
        %v877 = vtanh.pop %v539
        %v878 = vtanh.pop %v541
        %v879 = vtanh.pop %v592
        %v880 = vtanh.pop %v594
        %v881 = vtanh.pop %v645
        %v882 = vtanh.pop %v647
        %v883 = vtanh.pop %v698
        %v884 = vtanh.pop %v700
        %v885 = vtanh.pop %v751
        %v886 = vtanh.pop %v753
        %v887 = vtanh.pop %v804
        %v888 = vtanh.pop %v806
        %v889 = vtanh.pop %v857
        %v890 = vtanh.pop %v859
        %v891 = vtanh.pop %v490
        %v892 = vtanh.pop %v492
        %v893 = vtanh.pop %v543
        %v894 = vtanh.pop %v545
        %v895 = vtanh.pop %v596
        %v896 = vtanh.pop %v598
        %v897 = vtanh.pop %v649
        %v898 = vtanh.pop %v651
        %v899 = vtanh.pop %v702
        %v900 = vtanh.pop %v704
        %v901 = vtanh.pop %v755
        %v902 = vtanh.pop %v757
        %v903 = vtanh.pop %v808
        %v904 = vtanh.pop %v810
        %v905 = vtanh.pop %v861
        %v906 = vtanh.pop %v863
        %v907 = vtanh.pop %v496
        %v908 = vtanh.pop %v498
        %v909 = vtanh.pop %v549
        %v910 = vtanh.pop %v551
        %v911 = vtanh.pop %v602
        %v912 = vtanh.pop %v604
        %v913 = vtanh.pop %v655
        %v914 = vtanh.pop %v657
        %v915 = vtanh.pop %v708
        %v916 = vtanh.pop %v710
        %v917 = vtanh.pop %v761
        %v918 = vtanh.pop %v763
        %v919 = vtanh.pop %v814
        %v920 = vtanh.pop %v816
        %v921 = vtanh.pop %v867
        %v922 = vtanh.pop %v869
        %v923 = vtanh.pop %v500
        %v924 = vtanh.pop %v502
        %v925 = vtanh.pop %v553
        %v926 = vtanh.pop %v555
        %v927 = vtanh.pop %v606
        %v928 = vtanh.pop %v608
        %v929 = vtanh.pop %v659
        %v930 = vtanh.pop %v661
        %v931 = vtanh.pop %v712
        %v932 = vtanh.pop %v714
        %v933 = vtanh.pop %v765
        %v934 = vtanh.pop %v767
        %v935 = vtanh.pop %v818
        %v936 = vtanh.pop %v820
        %v937 = vtanh.pop %v871
        %v938 = vtanh.pop %v873
        %v939 = vld [vmem:[%s3] sm:$0xf]
        %v940 = vld [vmem:[%s3 + $0x4] sm:$0xf]
        %v941 = vld [vmem:[%s4] sm:$0xff]
        %v942 = vld [vmem:[%s4 + $0x8] sm:$0xff]
        %v943 = vpack.c.bf16 %v891, %v875
        %v944 = vpack.c.bf16 %v892, %v876
        %v945 = vpack.c.bf16 %v893, %v877
        %v946 = vpack.c.bf16 %v894, %v878
        %v947 = vpack.c.bf16 %v895, %v879
        %v948 = vpack.c.bf16 %v896, %v880
        %v949 = vpack.c.bf16 %v897, %v881
        %v950 = vpack.c.bf16 %v898, %v882
        %v951 = vpack.c.bf16 %v899, %v883
        %v952 = vpack.c.bf16 %v900, %v884
        %v953 = vpack.c.bf16 %v901, %v885
        %v954 = vpack.c.bf16 %v902, %v886
        %v955 = vpack.c.bf16 %v903, %v887
        %v956 = vpack.c.bf16 %v904, %v888
        %v957 = vpack.c.bf16 %v905, %v889
        %v958 = vpack.c.bf16 %v906, %v890
        %v959 = vpack.c.bf16 %v923, %v907
        %v960 = vpack.c.bf16 %v924, %v908
        %v961 = vpack.c.bf16 %v925, %v909
        %v962 = vpack.c.bf16 %v926, %v910
        %v963 = vpack.c.bf16 %v927, %v911
        %v964 = vpack.c.bf16 %v928, %v912
        %v965 = vpack.c.bf16 %v929, %v913
        %v966 = vpack.c.bf16 %v930, %v914
        %v967 = vpack.c.bf16 %v931, %v915
        %v968 = vpack.c.bf16 %v932, %v916
        %v969 = vpack.c.bf16 %v933, %v917
        %v970 = vpack.c.bf16 %v934, %v918
        %v971 = vpack.c.bf16 %v935, %v919
        %v972 = vpack.c.bf16 %v936, %v920
        %v973 = vpack.c.bf16 %v937, %v921
        %v974 = vpack.c.bf16 %v938, %v922
        %976 = vset.pattern.permute.xlu0 0
        %977 = vperm.xlu0 %976, %v941
        %v978 = vpop.permute.xlu0 %977
        %981 = vset.pattern.permute.xlu0 0
        %982 = vperm.xlu0 %981, %v942
        %v983 = vpop.permute.xlu0 %982
        %v987 = vunpack.c.l.b16 %v939
        %v988 = vunpack.c.l.b16 %v940
        %v989 = vpack.c.b16 %v988, %v987
        %vm990 = vcmask 261120
        %v992 = vsel %vm990, %v989, 0
        %994 = vmatprep.subr.bf16.mxu0 0
        %995 = vmatpush1.bf16.msra.mxu0 0
        %996 = vmatprep.subr.bf16.mxu0 0
        %997 = vmatpush1.bf16.msra.mxu0 0
        %998 = vmatprep.subr.bf16.mxu0 0
        %999 = vmatpush1.bf16.msra.mxu0 0
        %1000 = vmatprep.subr.bf16.mxu0 0
        %1001 = vmatpush1.bf16.msra.mxu0 0
        %1002 = vmatprep.subr.bf16.mxu0 0
        %1003 = vmatpush1.bf16.msra.mxu0 0
        %1004 = vmatprep.subr.bf16.mxu0 0
        %1005 = vmatpush1.bf16.msra.mxu0 0
        %1006 = vmatprep.subr.bf16.mxu0 %v960
        %1007 = vmatpush1.bf16.msra.mxu0 %v959
        %1008 = vmatprep.subr.bf16.mxu0 %v944
        %1009 = vmatpush1.bf16.msra.mxu0 %v943
        %1010 = vmatprep.subr.bf16.mxu0 0
        %1011 = vmatpush2.bf16.msra.mxu0 0
        %1012 = vmatprep.subr.bf16.mxu0 0
        %1013 = vmatpush2.bf16.msra.mxu0 0
        %1014 = vmatprep.subr.bf16.mxu0 0
        %1015 = vmatpush2.bf16.msra.mxu0 0
        %1016 = vmatprep.subr.bf16.mxu0 0
        %1017 = vmatpush2.bf16.msra.mxu0 0
        %1018 = vmatprep.subr.bf16.mxu0 0
        %1019 = vmatpush2.bf16.msra.mxu0 0
        %1020 = vmatprep.subr.bf16.mxu0 0
        %1021 = vmatpush2.bf16.msra.mxu0 0
        %1022 = vmatprep.subr.bf16.mxu0 0
        %1023 = vmatpush2.bf16.msra.mxu0 0
        %1024 = vmatprep.subr.bf16.mxu0 0
        %1025 = vmatpush2.bf16.msra.mxu0 0
        %1026 = vmatprep.mubr.bf16.mxu0 0
        %1027 = vmatmul.mubr.bf16.gmra.mxu0 %v992
        %v1028 = vpop.f32.mrf.mxu0
        %v1029 = vadd.f32 %v978, %v1028
        %v1030 = vpop.f32.mrf.mxu0
        %v1031 = vadd.f32 %v978, %v1030
        %v1032 = vpop.f32.mrf.mxu0
        %v1033 = vadd.f32 %v983, %v1032
        %v1034 = vpop.f32.mrf.mxu0
        %v1035 = vadd.f32 %v983, %v1034
        %1036 = vdwg.mxu0
        %1037 = vmatprep.subr.bf16.mxu0 0
        %1038 = vmatpush1.bf16.msra.mxu0 0
        %1039 = vmatprep.subr.bf16.mxu0 0
        %1040 = vmatpush1.bf16.msra.mxu0 0
        %1041 = vmatprep.subr.bf16.mxu0 0
        %1042 = vmatpush1.bf16.msra.mxu0 0
        %1043 = vmatprep.subr.bf16.mxu0 0
        %1044 = vmatpush1.bf16.msra.mxu0 0
        %1045 = vmatprep.subr.bf16.mxu0 0
        %1046 = vmatpush1.bf16.msra.mxu0 0
        %1047 = vmatprep.subr.bf16.mxu0 0
        %1048 = vmatpush1.bf16.msra.mxu0 0
        %1049 = vmatprep.subr.bf16.mxu0 %v962
        %1050 = vmatpush1.bf16.msra.mxu0 %v961
        %1051 = vmatprep.subr.bf16.mxu0 %v946
        %1052 = vmatpush1.bf16.msra.mxu0 %v945
        %1053 = vmatprep.subr.bf16.mxu0 0
        %1054 = vmatpush2.bf16.msra.mxu0 0
        %1055 = vmatprep.subr.bf16.mxu0 0
        %1056 = vmatpush2.bf16.msra.mxu0 0
        %1057 = vmatprep.subr.bf16.mxu0 0
        %1058 = vmatpush2.bf16.msra.mxu0 0
        %1059 = vmatprep.subr.bf16.mxu0 0
        %1060 = vmatpush2.bf16.msra.mxu0 0
        %1061 = vmatprep.subr.bf16.mxu0 0
        %1062 = vmatpush2.bf16.msra.mxu0 0
        %1063 = vmatprep.subr.bf16.mxu0 0
        %1064 = vmatpush2.bf16.msra.mxu0 0
        %1065 = vmatprep.subr.bf16.mxu0 0
        %1066 = vmatpush2.bf16.msra.mxu0 0
        %1067 = vmatprep.subr.bf16.mxu0 0
        %1068 = vmatpush2.bf16.msra.mxu0 0
        %1069 = vmatprep.mubr.bf16.mxu0 0
        %1070 = vmatmul.mubr.bf16.gmra.mxu0 %v992
        %v1071 = vpop.f32.mrf.mxu0
        %v1072 = vadd.f32 %v978, %v1071
        %v1073 = vpop.f32.mrf.mxu0
        %v1074 = vadd.f32 %v978, %v1073
        %v1075 = vpop.f32.mrf.mxu0
        %v1076 = vadd.f32 %v983, %v1075
        %v1077 = vpop.f32.mrf.mxu0
        %v1078 = vadd.f32 %v983, %v1077
        %1079 = vdwg.mxu0
        %1080 = vmatprep.subr.bf16.mxu0 0
        %1081 = vmatpush1.bf16.msra.mxu0 0
        %1082 = vmatprep.subr.bf16.mxu0 0
        %1083 = vmatpush1.bf16.msra.mxu0 0
        %1084 = vmatprep.subr.bf16.mxu0 0
        %1085 = vmatpush1.bf16.msra.mxu0 0
        %1086 = vmatprep.subr.bf16.mxu0 0
        %1087 = vmatpush1.bf16.msra.mxu0 0
        %1088 = vmatprep.subr.bf16.mxu0 0
        %1089 = vmatpush1.bf16.msra.mxu0 0
        %1090 = vmatprep.subr.bf16.mxu0 0
        %1091 = vmatpush1.bf16.msra.mxu0 0
        %1092 = vmatprep.subr.bf16.mxu0 %v964
        %1093 = vmatpush1.bf16.msra.mxu0 %v963
        %1094 = vmatprep.subr.bf16.mxu0 %v948
        %1095 = vmatpush1.bf16.msra.mxu0 %v947
        %1096 = vmatprep.subr.bf16.mxu0 0
        %1097 = vmatpush2.bf16.msra.mxu0 0
        %1098 = vmatprep.subr.bf16.mxu0 0
        %1099 = vmatpush2.bf16.msra.mxu0 0
        %1100 = vmatprep.subr.bf16.mxu0 0
        %1101 = vmatpush2.bf16.msra.mxu0 0
        %1102 = vmatprep.subr.bf16.mxu0 0
        %1103 = vmatpush2.bf16.msra.mxu0 0
        %1104 = vmatprep.subr.bf16.mxu0 0
        %1105 = vmatpush2.bf16.msra.mxu0 0
        %1106 = vmatprep.subr.bf16.mxu0 0
        %1107 = vmatpush2.bf16.msra.mxu0 0
        %1108 = vmatprep.subr.bf16.mxu0 0
        %1109 = vmatpush2.bf16.msra.mxu0 0
        %1110 = vmatprep.subr.bf16.mxu0 0
        %1111 = vmatpush2.bf16.msra.mxu0 0
        %1112 = vmatprep.mubr.bf16.mxu0 0
        %1113 = vmatmul.mubr.bf16.gmra.mxu0 %v992
        %v1114 = vpop.f32.mrf.mxu0
        %v1115 = vadd.f32 %v978, %v1114
        %v1116 = vpop.f32.mrf.mxu0
        %v1117 = vadd.f32 %v978, %v1116
        %v1118 = vpop.f32.mrf.mxu0
        %v1119 = vadd.f32 %v983, %v1118
        %v1120 = vpop.f32.mrf.mxu0
        %v1121 = vadd.f32 %v983, %v1120
        %1122 = vdwg.mxu0
        %1123 = vmatprep.subr.bf16.mxu0 0
        %1124 = vmatpush1.bf16.msra.mxu0 0
        %1125 = vmatprep.subr.bf16.mxu0 0
        %1126 = vmatpush1.bf16.msra.mxu0 0
        %1127 = vmatprep.subr.bf16.mxu0 0
        %1128 = vmatpush1.bf16.msra.mxu0 0
        %1129 = vmatprep.subr.bf16.mxu0 0
        %1130 = vmatpush1.bf16.msra.mxu0 0
        %1131 = vmatprep.subr.bf16.mxu0 0
        %1132 = vmatpush1.bf16.msra.mxu0 0
        %1133 = vmatprep.subr.bf16.mxu0 0
        %1134 = vmatpush1.bf16.msra.mxu0 0
        %1135 = vmatprep.subr.bf16.mxu0 %v966
        %1136 = vmatpush1.bf16.msra.mxu0 %v965
        %1137 = vmatprep.subr.bf16.mxu0 %v950
        %1138 = vmatpush1.bf16.msra.mxu0 %v949
        %1139 = vmatprep.subr.bf16.mxu0 0
        %1140 = vmatpush2.bf16.msra.mxu0 0
        %1141 = vmatprep.subr.bf16.mxu0 0
        %1142 = vmatpush2.bf16.msra.mxu0 0
        %1143 = vmatprep.subr.bf16.mxu0 0
        %1144 = vmatpush2.bf16.msra.mxu0 0
        %1145 = vmatprep.subr.bf16.mxu0 0
        %1146 = vmatpush2.bf16.msra.mxu0 0
        %1147 = vmatprep.subr.bf16.mxu0 0
        %1148 = vmatpush2.bf16.msra.mxu0 0
        %1149 = vmatprep.subr.bf16.mxu0 0
        %1150 = vmatpush2.bf16.msra.mxu0 0
        %1151 = vmatprep.subr.bf16.mxu0 0
        %1152 = vmatpush2.bf16.msra.mxu0 0
        %1153 = vmatprep.subr.bf16.mxu0 0
        %1154 = vmatpush2.bf16.msra.mxu0 0
        %1155 = vmatprep.mubr.bf16.mxu0 0
        %1156 = vmatmul.mubr.bf16.gmra.mxu0 %v992
        %v1157 = vpop.f32.mrf.mxu0
        %v1158 = vadd.f32 %v978, %v1157
        %v1159 = vpop.f32.mrf.mxu0
        %v1160 = vadd.f32 %v978, %v1159
        %v1161 = vpop.f32.mrf.mxu0
        %v1162 = vadd.f32 %v983, %v1161
        %v1163 = vpop.f32.mrf.mxu0
        %v1164 = vadd.f32 %v983, %v1163
        %1165 = vdwg.mxu0
        %1166 = vmatprep.subr.bf16.mxu0 0
        %1167 = vmatpush1.bf16.msra.mxu0 0
        %1168 = vmatprep.subr.bf16.mxu0 0
        %1169 = vmatpush1.bf16.msra.mxu0 0
        %1170 = vmatprep.subr.bf16.mxu0 0
        %1171 = vmatpush1.bf16.msra.mxu0 0
        %1172 = vmatprep.subr.bf16.mxu0 0
        %1173 = vmatpush1.bf16.msra.mxu0 0
        %1174 = vmatprep.subr.bf16.mxu0 0
        %1175 = vmatpush1.bf16.msra.mxu0 0
        %1176 = vmatprep.subr.bf16.mxu0 0
        %1177 = vmatpush1.bf16.msra.mxu0 0
        %1178 = vmatprep.subr.bf16.mxu0 %v968
        %1179 = vmatpush1.bf16.msra.mxu0 %v967
        %1180 = vmatprep.subr.bf16.mxu0 %v952
        %1181 = vmatpush1.bf16.msra.mxu0 %v951
        %1182 = vmatprep.subr.bf16.mxu0 0
        %1183 = vmatpush2.bf16.msra.mxu0 0
        %1184 = vmatprep.subr.bf16.mxu0 0
        %1185 = vmatpush2.bf16.msra.mxu0 0
        %1186 = vmatprep.subr.bf16.mxu0 0
        %1187 = vmatpush2.bf16.msra.mxu0 0
        %1188 = vmatprep.subr.bf16.mxu0 0
        %1189 = vmatpush2.bf16.msra.mxu0 0
        %1190 = vmatprep.subr.bf16.mxu0 0
        %1191 = vmatpush2.bf16.msra.mxu0 0
        %1192 = vmatprep.subr.bf16.mxu0 0
        %1193 = vmatpush2.bf16.msra.mxu0 0
        %1194 = vmatprep.subr.bf16.mxu0 0
        %1195 = vmatpush2.bf16.msra.mxu0 0
        %1196 = vmatprep.subr.bf16.mxu0 0
        %1197 = vmatpush2.bf16.msra.mxu0 0
        %1198 = vmatprep.mubr.bf16.mxu0 0
        %1199 = vmatmul.mubr.bf16.gmra.mxu0 %v992
        %v1200 = vpop.f32.mrf.mxu0
        %v1201 = vadd.f32 %v978, %v1200
        %v1202 = vpop.f32.mrf.mxu0
        %v1203 = vadd.f32 %v978, %v1202
        %v1204 = vpop.f32.mrf.mxu0
        %v1205 = vadd.f32 %v983, %v1204
        %v1206 = vpop.f32.mrf.mxu0
        %v1207 = vadd.f32 %v983, %v1206
        %1208 = vdwg.mxu0
        %1209 = vmatprep.subr.bf16.mxu0 0
        %1210 = vmatpush1.bf16.msra.mxu0 0
        %1211 = vmatprep.subr.bf16.mxu0 0
        %1212 = vmatpush1.bf16.msra.mxu0 0
        %1213 = vmatprep.subr.bf16.mxu0 0
        %1214 = vmatpush1.bf16.msra.mxu0 0
        %1215 = vmatprep.subr.bf16.mxu0 0
        %1216 = vmatpush1.bf16.msra.mxu0 0
        %1217 = vmatprep.subr.bf16.mxu0 0
        %1218 = vmatpush1.bf16.msra.mxu0 0
        %1219 = vmatprep.subr.bf16.mxu0 0
        %1220 = vmatpush1.bf16.msra.mxu0 0
        %1221 = vmatprep.subr.bf16.mxu0 %v970
        %1222 = vmatpush1.bf16.msra.mxu0 %v969
        %1223 = vmatprep.subr.bf16.mxu0 %v954
        %1224 = vmatpush1.bf16.msra.mxu0 %v953
        %1225 = vmatprep.subr.bf16.mxu0 0
        %1226 = vmatpush2.bf16.msra.mxu0 0
        %1227 = vmatprep.subr.bf16.mxu0 0
        %1228 = vmatpush2.bf16.msra.mxu0 0
        %1229 = vmatprep.subr.bf16.mxu0 0
        %1230 = vmatpush2.bf16.msra.mxu0 0
        %1231 = vmatprep.subr.bf16.mxu0 0
        %1232 = vmatpush2.bf16.msra.mxu0 0
        %1233 = vmatprep.subr.bf16.mxu0 0
        %1234 = vmatpush2.bf16.msra.mxu0 0
        %1235 = vmatprep.subr.bf16.mxu0 0
        %1236 = vmatpush2.bf16.msra.mxu0 0
        %1237 = vmatprep.subr.bf16.mxu0 0
        %1238 = vmatpush2.bf16.msra.mxu0 0
        %1239 = vmatprep.subr.bf16.mxu0 0
        %1240 = vmatpush2.bf16.msra.mxu0 0
        %1241 = vmatprep.mubr.bf16.mxu0 0
        %1242 = vmatmul.mubr.bf16.gmra.mxu0 %v992
        %v1243 = vpop.f32.mrf.mxu0
        %v1244 = vadd.f32 %v978, %v1243
        %v1245 = vpop.f32.mrf.mxu0
        %v1246 = vadd.f32 %v978, %v1245
        %v1247 = vpop.f32.mrf.mxu0
        %v1248 = vadd.f32 %v983, %v1247
        %v1249 = vpop.f32.mrf.mxu0
        %v1250 = vadd.f32 %v983, %v1249
        %1251 = vdwg.mxu0
        %1252 = vmatprep.subr.bf16.mxu0 0
        %1253 = vmatpush1.bf16.msra.mxu0 0
        %1254 = vmatprep.subr.bf16.mxu0 0
        %1255 = vmatpush1.bf16.msra.mxu0 0
        %1256 = vmatprep.subr.bf16.mxu0 0
        %1257 = vmatpush1.bf16.msra.mxu0 0
        %1258 = vmatprep.subr.bf16.mxu0 0
        %1259 = vmatpush1.bf16.msra.mxu0 0
        %1260 = vmatprep.subr.bf16.mxu0 0
        %1261 = vmatpush1.bf16.msra.mxu0 0
        %1262 = vmatprep.subr.bf16.mxu0 0
        %1263 = vmatpush1.bf16.msra.mxu0 0
        %1264 = vmatprep.subr.bf16.mxu0 %v972
        %1265 = vmatpush1.bf16.msra.mxu0 %v971
        %1266 = vmatprep.subr.bf16.mxu0 %v956
        %1267 = vmatpush1.bf16.msra.mxu0 %v955
        %1268 = vmatprep.subr.bf16.mxu0 0
        %1269 = vmatpush2.bf16.msra.mxu0 0
        %1270 = vmatprep.subr.bf16.mxu0 0
        %1271 = vmatpush2.bf16.msra.mxu0 0
        %1272 = vmatprep.subr.bf16.mxu0 0
        %1273 = vmatpush2.bf16.msra.mxu0 0
        %1274 = vmatprep.subr.bf16.mxu0 0
        %1275 = vmatpush2.bf16.msra.mxu0 0
        %1276 = vmatprep.subr.bf16.mxu0 0
        %1277 = vmatpush2.bf16.msra.mxu0 0
        %1278 = vmatprep.subr.bf16.mxu0 0
        %1279 = vmatpush2.bf16.msra.mxu0 0
        %1280 = vmatprep.subr.bf16.mxu0 0
        %1281 = vmatpush2.bf16.msra.mxu0 0
        %1282 = vmatprep.subr.bf16.mxu0 0
        %1283 = vmatpush2.bf16.msra.mxu0 0
        %1284 = vmatprep.mubr.bf16.mxu0 0
        %1285 = vmatmul.mubr.bf16.gmra.mxu0 %v992
        %v1286 = vpop.f32.mrf.mxu0
        %v1287 = vadd.f32 %v978, %v1286
        %v1288 = vpop.f32.mrf.mxu0
        %v1289 = vadd.f32 %v978, %v1288
        %v1290 = vpop.f32.mrf.mxu0
        %v1291 = vadd.f32 %v983, %v1290
        %v1292 = vpop.f32.mrf.mxu0
        %v1293 = vadd.f32 %v983, %v1292
        %1294 = vdwg.mxu0
        %1295 = vmatprep.subr.bf16.mxu0 0
        %1296 = vmatpush1.bf16.msra.mxu0 0
        %1297 = vmatprep.subr.bf16.mxu0 0
        %1298 = vmatpush1.bf16.msra.mxu0 0
        %1299 = vmatprep.subr.bf16.mxu0 0
        %1300 = vmatpush1.bf16.msra.mxu0 0
        %1301 = vmatprep.subr.bf16.mxu0 0
        %1302 = vmatpush1.bf16.msra.mxu0 0
        %1303 = vmatprep.subr.bf16.mxu0 0
        %1304 = vmatpush1.bf16.msra.mxu0 0
        %1305 = vmatprep.subr.bf16.mxu0 0
        %1306 = vmatpush1.bf16.msra.mxu0 0
        %1307 = vmatprep.subr.bf16.mxu0 %v974
        %1308 = vmatpush1.bf16.msra.mxu0 %v973
        %1309 = vmatprep.subr.bf16.mxu0 %v958
        %1310 = vmatpush1.bf16.msra.mxu0 %v957
        %1311 = vmatprep.subr.bf16.mxu0 0
        %1312 = vmatpush2.bf16.msra.mxu0 0
        %1313 = vmatprep.subr.bf16.mxu0 0
        %1314 = vmatpush2.bf16.msra.mxu0 0
        %1315 = vmatprep.subr.bf16.mxu0 0
        %1316 = vmatpush2.bf16.msra.mxu0 0
        %1317 = vmatprep.subr.bf16.mxu0 0
        %1318 = vmatpush2.bf16.msra.mxu0 0
        %1319 = vmatprep.subr.bf16.mxu0 0
        %1320 = vmatpush2.bf16.msra.mxu0 0
        %1321 = vmatprep.subr.bf16.mxu0 0
        %1322 = vmatpush2.bf16.msra.mxu0 0
        %1323 = vmatprep.subr.bf16.mxu0 0
        %1324 = vmatpush2.bf16.msra.mxu0 0
        %1325 = vmatprep.subr.bf16.mxu0 0
        %1326 = vmatpush2.bf16.msra.mxu0 0
        %1327 = vmatprep.mubr.bf16.mxu0 0
        %1328 = vmatmul.mubr.bf16.gmra.mxu0 %v992
        %v1329 = vpop.f32.mrf.mxu0
        %v1330 = vadd.f32 %v978, %v1329
        %v1331 = vpop.f32.mrf.mxu0
        %v1332 = vadd.f32 %v978, %v1331
        %v1333 = vpop.f32.mrf.mxu0
        %v1334 = vadd.f32 %v983, %v1333
        %v1335 = vpop.f32.mrf.mxu0
        %v1336 = vadd.f32 %v983, %v1335
        %1337 = vdwg.mxu0
        %v1338 = vtanh.pop %v1029
        %v1339 = vtanh.pop %v1031
        %v1340 = vtanh.pop %v1072
        %v1341 = vtanh.pop %v1074
        %v1342 = vtanh.pop %v1115
        %v1343 = vtanh.pop %v1117
        %v1344 = vtanh.pop %v1158
        %v1345 = vtanh.pop %v1160
        %v1346 = vtanh.pop %v1201
        %v1347 = vtanh.pop %v1203
        %v1348 = vtanh.pop %v1244
        %v1349 = vtanh.pop %v1246
        %v1350 = vtanh.pop %v1287
        %v1351 = vtanh.pop %v1289
        %v1352 = vtanh.pop %v1330
        %v1353 = vtanh.pop %v1332
        %v1354 = vtanh.pop %v1033
        %v1355 = vtanh.pop %v1035
        %v1356 = vtanh.pop %v1076
        %v1357 = vtanh.pop %v1078
        %v1358 = vtanh.pop %v1119
        %v1359 = vtanh.pop %v1121
        %v1360 = vtanh.pop %v1162
        %v1361 = vtanh.pop %v1164
        %v1362 = vtanh.pop %v1205
        %v1363 = vtanh.pop %v1207
        %v1364 = vtanh.pop %v1248
        %v1365 = vtanh.pop %v1250
        %v1366 = vtanh.pop %v1291
        %v1367 = vtanh.pop %v1293
        %v1368 = vtanh.pop %v1334
        %v1369 = vtanh.pop %v1336
        %v1370 = vld [vmem:[%s5] sm:$0x3]
        %v1371 = vld [vmem:[%s6] sm:$0xf]
        %v1372 = vpack.c.bf16 %v1354, %v1338
        %v1373 = vpack.c.bf16 %v1355, %v1339
        %v1374 = vpack.c.bf16 %v1356, %v1340
        %v1375 = vpack.c.bf16 %v1357, %v1341
        %v1376 = vpack.c.bf16 %v1358, %v1342
        %v1377 = vpack.c.bf16 %v1359, %v1343
        %v1378 = vpack.c.bf16 %v1360, %v1344
        %v1379 = vpack.c.bf16 %v1361, %v1345
        %v1380 = vpack.c.bf16 %v1362, %v1346
        %v1381 = vpack.c.bf16 %v1363, %v1347
        %v1382 = vpack.c.bf16 %v1364, %v1348
        %v1383 = vpack.c.bf16 %v1365, %v1349
        %v1384 = vpack.c.bf16 %v1366, %v1350
        %v1385 = vpack.c.bf16 %v1367, %v1351
        %v1386 = vpack.c.bf16 %v1368, %v1352
        %v1387 = vpack.c.bf16 %v1369, %v1353
        %1389 = vset.pattern.permute.xlu0 0
        %1390 = vperm.xlu0 %1389, %v1371
        %v1391 = vpop.permute.xlu0 %1390
        %vm1393 = vcmask 130048
        %v1395 = vsel %vm1393, %v1370, 0
        %1397 = vmatprep.subr.bf16.mxu0 0
        %1398 = vmatpush1.bf16.msra.mxu0 0
        %1399 = vmatprep.subr.bf16.mxu0 0
        %1400 = vmatpush1.bf16.msra.mxu0 0
        %1401 = vmatprep.subr.bf16.mxu0 0
        %1402 = vmatpush1.bf16.msra.mxu0 0
        %1403 = vmatprep.subr.bf16.mxu0 0
        %1404 = vmatpush1.bf16.msra.mxu0 0
        %1405 = vmatprep.subr.bf16.mxu0 0
        %1406 = vmatpush1.bf16.msra.mxu0 0
        %1407 = vmatprep.subr.bf16.mxu0 0
        %1408 = vmatpush1.bf16.msra.mxu0 0
        %1409 = vmatprep.subr.bf16.mxu0 0
        %1410 = vmatpush1.bf16.msra.mxu0 0
        %1411 = vmatprep.subr.bf16.mxu0 %v1373
        %1412 = vmatpush1.bf16.msra.mxu0 %v1372
        %1413 = vmatprep.subr.bf16.mxu0 0
        %1414 = vmatpush2.bf16.msra.mxu0 0
        %1415 = vmatprep.subr.bf16.mxu0 0
        %1416 = vmatpush2.bf16.msra.mxu0 0
        %1417 = vmatprep.subr.bf16.mxu0 0
        %1418 = vmatpush2.bf16.msra.mxu0 0
        %1419 = vmatprep.subr.bf16.mxu0 0
        %1420 = vmatpush2.bf16.msra.mxu0 0
        %1421 = vmatprep.subr.bf16.mxu0 0
        %1422 = vmatpush2.bf16.msra.mxu0 0
        %1423 = vmatprep.subr.bf16.mxu0 0
        %1424 = vmatpush2.bf16.msra.mxu0 0
        %1425 = vmatprep.subr.bf16.mxu0 0
        %1426 = vmatpush2.bf16.msra.mxu0 0
        %1427 = vmatprep.subr.bf16.mxu0 0
        %1428 = vmatpush2.bf16.msra.mxu0 0
        %1429 = vmatprep.mubr.bf16.mxu0 0
        %1430 = vmatmul.mubr.bf16.gmra.mxu0 %v1395
        %v1431 = vpop.f32.mrf.mxu0
        %v1432 = vadd.f32 %v1391, %v1431
        %v1433 = vpop.f32.mrf.mxu0
        %v1434 = vadd.f32 %v1391, %v1433
        %v1435 = vpop.f32.mrf.mxu0
        %v1436 = vpop.f32.mrf.mxu0
        %1437 = vdwg.mxu0
        %1438 = vmatprep.subr.bf16.mxu0 0
        %1439 = vmatpush1.bf16.msra.mxu0 0
        %1440 = vmatprep.subr.bf16.mxu0 0
        %1441 = vmatpush1.bf16.msra.mxu0 0
        %1442 = vmatprep.subr.bf16.mxu0 0
        %1443 = vmatpush1.bf16.msra.mxu0 0
        %1444 = vmatprep.subr.bf16.mxu0 0
        %1445 = vmatpush1.bf16.msra.mxu0 0
        %1446 = vmatprep.subr.bf16.mxu0 0
        %1447 = vmatpush1.bf16.msra.mxu0 0
        %1448 = vmatprep.subr.bf16.mxu0 0
        %1449 = vmatpush1.bf16.msra.mxu0 0
        %1450 = vmatprep.subr.bf16.mxu0 0
        %1451 = vmatpush1.bf16.msra.mxu0 0
        %1452 = vmatprep.subr.bf16.mxu0 %v1375
        %1453 = vmatpush1.bf16.msra.mxu0 %v1374
        %1454 = vmatprep.subr.bf16.mxu0 0
        %1455 = vmatpush2.bf16.msra.mxu0 0
        %1456 = vmatprep.subr.bf16.mxu0 0
        %1457 = vmatpush2.bf16.msra.mxu0 0
        %1458 = vmatprep.subr.bf16.mxu0 0
        %1459 = vmatpush2.bf16.msra.mxu0 0
        %1460 = vmatprep.subr.bf16.mxu0 0
        %1461 = vmatpush2.bf16.msra.mxu0 0
        %1462 = vmatprep.subr.bf16.mxu0 0
        %1463 = vmatpush2.bf16.msra.mxu0 0
        %1464 = vmatprep.subr.bf16.mxu0 0
        %1465 = vmatpush2.bf16.msra.mxu0 0
        %1466 = vmatprep.subr.bf16.mxu0 0
        %1467 = vmatpush2.bf16.msra.mxu0 0
        %1468 = vmatprep.subr.bf16.mxu0 0
        %1469 = vmatpush2.bf16.msra.mxu0 0
        %1470 = vmatprep.mubr.bf16.mxu0 0
        %1471 = vmatmul.mubr.bf16.gmra.mxu0 %v1395
        %v1472 = vpop.f32.mrf.mxu0
        %v1473 = vadd.f32 %v1391, %v1472
        %v1474 = vpop.f32.mrf.mxu0
        %v1475 = vadd.f32 %v1391, %v1474
        %v1476 = vpop.f32.mrf.mxu0
        %v1477 = vpop.f32.mrf.mxu0
        %1478 = vdwg.mxu0
        %1479 = vmatprep.subr.bf16.mxu0 0
        %1480 = vmatpush1.bf16.msra.mxu0 0
        %1481 = vmatprep.subr.bf16.mxu0 0
        %1482 = vmatpush1.bf16.msra.mxu0 0
        %1483 = vmatprep.subr.bf16.mxu0 0
        %1484 = vmatpush1.bf16.msra.mxu0 0
        %1485 = vmatprep.subr.bf16.mxu0 0
        %1486 = vmatpush1.bf16.msra.mxu0 0
        %1487 = vmatprep.subr.bf16.mxu0 0
        %1488 = vmatpush1.bf16.msra.mxu0 0
        %1489 = vmatprep.subr.bf16.mxu0 0
        %1490 = vmatpush1.bf16.msra.mxu0 0
        %1491 = vmatprep.subr.bf16.mxu0 0
        %1492 = vmatpush1.bf16.msra.mxu0 0
        %1493 = vmatprep.subr.bf16.mxu0 %v1377
        %1494 = vmatpush1.bf16.msra.mxu0 %v1376
        %1495 = vmatprep.subr.bf16.mxu0 0
        %1496 = vmatpush2.bf16.msra.mxu0 0
        %1497 = vmatprep.subr.bf16.mxu0 0
        %1498 = vmatpush2.bf16.msra.mxu0 0
        %1499 = vmatprep.subr.bf16.mxu0 0
        %1500 = vmatpush2.bf16.msra.mxu0 0
        %1501 = vmatprep.subr.bf16.mxu0 0
        %1502 = vmatpush2.bf16.msra.mxu0 0
        %1503 = vmatprep.subr.bf16.mxu0 0
        %1504 = vmatpush2.bf16.msra.mxu0 0
        %1505 = vmatprep.subr.bf16.mxu0 0
        %1506 = vmatpush2.bf16.msra.mxu0 0
        %1507 = vmatprep.subr.bf16.mxu0 0
        %1508 = vmatpush2.bf16.msra.mxu0 0
        %1509 = vmatprep.subr.bf16.mxu0 0
        %1510 = vmatpush2.bf16.msra.mxu0 0
        %1511 = vmatprep.mubr.bf16.mxu0 0
        %1512 = vmatmul.mubr.bf16.gmra.mxu0 %v1395
        %v1513 = vpop.f32.mrf.mxu0
        %v1514 = vadd.f32 %v1391, %v1513
        %v1515 = vpop.f32.mrf.mxu0
        %v1516 = vadd.f32 %v1391, %v1515
        %v1517 = vpop.f32.mrf.mxu0
        %v1518 = vpop.f32.mrf.mxu0
        %1519 = vdwg.mxu0
        %1520 = vmatprep.subr.bf16.mxu0 0
        %1521 = vmatpush1.bf16.msra.mxu0 0
        %1522 = vmatprep.subr.bf16.mxu0 0
        %1523 = vmatpush1.bf16.msra.mxu0 0
        %1524 = vmatprep.subr.bf16.mxu0 0
        %1525 = vmatpush1.bf16.msra.mxu0 0
        %1526 = vmatprep.subr.bf16.mxu0 0
        %1527 = vmatpush1.bf16.msra.mxu0 0
        %1528 = vmatprep.subr.bf16.mxu0 0
        %1529 = vmatpush1.bf16.msra.mxu0 0
        %1530 = vmatprep.subr.bf16.mxu0 0
        %1531 = vmatpush1.bf16.msra.mxu0 0
        %1532 = vmatprep.subr.bf16.mxu0 0
        %1533 = vmatpush1.bf16.msra.mxu0 0
        %1534 = vmatprep.subr.bf16.mxu0 %v1379
        %1535 = vmatpush1.bf16.msra.mxu0 %v1378
        %1536 = vmatprep.subr.bf16.mxu0 0
        %1537 = vmatpush2.bf16.msra.mxu0 0
        %1538 = vmatprep.subr.bf16.mxu0 0
        %1539 = vmatpush2.bf16.msra.mxu0 0
        %1540 = vmatprep.subr.bf16.mxu0 0
        %1541 = vmatpush2.bf16.msra.mxu0 0
        %1542 = vmatprep.subr.bf16.mxu0 0
        %1543 = vmatpush2.bf16.msra.mxu0 0
        %1544 = vmatprep.subr.bf16.mxu0 0
        %1545 = vmatpush2.bf16.msra.mxu0 0
        %1546 = vmatprep.subr.bf16.mxu0 0
        %1547 = vmatpush2.bf16.msra.mxu0 0
        %1548 = vmatprep.subr.bf16.mxu0 0
        %1549 = vmatpush2.bf16.msra.mxu0 0
        %1550 = vmatprep.subr.bf16.mxu0 0
        %1551 = vmatpush2.bf16.msra.mxu0 0
        %1552 = vmatprep.mubr.bf16.mxu0 0
        %1553 = vmatmul.mubr.bf16.gmra.mxu0 %v1395
        %v1554 = vpop.f32.mrf.mxu0
        %v1555 = vadd.f32 %v1391, %v1554
        %v1556 = vpop.f32.mrf.mxu0
        %v1557 = vadd.f32 %v1391, %v1556
        %v1558 = vpop.f32.mrf.mxu0
        %v1559 = vpop.f32.mrf.mxu0
        %1560 = vdwg.mxu0
        %1561 = vmatprep.subr.bf16.mxu0 0
        %1562 = vmatpush1.bf16.msra.mxu0 0
        %1563 = vmatprep.subr.bf16.mxu0 0
        %1564 = vmatpush1.bf16.msra.mxu0 0
        %1565 = vmatprep.subr.bf16.mxu0 0
        %1566 = vmatpush1.bf16.msra.mxu0 0
        %1567 = vmatprep.subr.bf16.mxu0 0
        %1568 = vmatpush1.bf16.msra.mxu0 0
        %1569 = vmatprep.subr.bf16.mxu0 0
        %1570 = vmatpush1.bf16.msra.mxu0 0
        %1571 = vmatprep.subr.bf16.mxu0 0
        %1572 = vmatpush1.bf16.msra.mxu0 0
        %1573 = vmatprep.subr.bf16.mxu0 0
        %1574 = vmatpush1.bf16.msra.mxu0 0
        %1575 = vmatprep.subr.bf16.mxu0 %v1381
        %1576 = vmatpush1.bf16.msra.mxu0 %v1380
        %1577 = vmatprep.subr.bf16.mxu0 0
        %1578 = vmatpush2.bf16.msra.mxu0 0
        %1579 = vmatprep.subr.bf16.mxu0 0
        %1580 = vmatpush2.bf16.msra.mxu0 0
        %1581 = vmatprep.subr.bf16.mxu0 0
        %1582 = vmatpush2.bf16.msra.mxu0 0
        %1583 = vmatprep.subr.bf16.mxu0 0
        %1584 = vmatpush2.bf16.msra.mxu0 0
        %1585 = vmatprep.subr.bf16.mxu0 0
        %1586 = vmatpush2.bf16.msra.mxu0 0
        %1587 = vmatprep.subr.bf16.mxu0 0
        %1588 = vmatpush2.bf16.msra.mxu0 0
        %1589 = vmatprep.subr.bf16.mxu0 0
        %1590 = vmatpush2.bf16.msra.mxu0 0
        %1591 = vmatprep.subr.bf16.mxu0 0
        %1592 = vmatpush2.bf16.msra.mxu0 0
        %1593 = vmatprep.mubr.bf16.mxu0 0
        %1594 = vmatmul.mubr.bf16.gmra.mxu0 %v1395
        %v1595 = vpop.f32.mrf.mxu0
        %v1596 = vadd.f32 %v1391, %v1595
        %v1597 = vpop.f32.mrf.mxu0
        %v1598 = vadd.f32 %v1391, %v1597
        %v1599 = vpop.f32.mrf.mxu0
        %v1600 = vpop.f32.mrf.mxu0
        %1601 = vdwg.mxu0
        %1602 = vmatprep.subr.bf16.mxu0 0
        %1603 = vmatpush1.bf16.msra.mxu0 0
        %1604 = vmatprep.subr.bf16.mxu0 0
        %1605 = vmatpush1.bf16.msra.mxu0 0
        %1606 = vmatprep.subr.bf16.mxu0 0
        %1607 = vmatpush1.bf16.msra.mxu0 0
        %1608 = vmatprep.subr.bf16.mxu0 0
        %1609 = vmatpush1.bf16.msra.mxu0 0
        %1610 = vmatprep.subr.bf16.mxu0 0
        %1611 = vmatpush1.bf16.msra.mxu0 0
        %1612 = vmatprep.subr.bf16.mxu0 0
        %1613 = vmatpush1.bf16.msra.mxu0 0
        %1614 = vmatprep.subr.bf16.mxu0 0
        %1615 = vmatpush1.bf16.msra.mxu0 0
        %1616 = vmatprep.subr.bf16.mxu0 %v1383
        %1617 = vmatpush1.bf16.msra.mxu0 %v1382
        %1618 = vmatprep.subr.bf16.mxu0 0
        %1619 = vmatpush2.bf16.msra.mxu0 0
        %1620 = vmatprep.subr.bf16.mxu0 0
        %1621 = vmatpush2.bf16.msra.mxu0 0
        %1622 = vmatprep.subr.bf16.mxu0 0
        %1623 = vmatpush2.bf16.msra.mxu0 0
        %1624 = vmatprep.subr.bf16.mxu0 0
        %1625 = vmatpush2.bf16.msra.mxu0 0
        %1626 = vmatprep.subr.bf16.mxu0 0
        %1627 = vmatpush2.bf16.msra.mxu0 0
        %1628 = vmatprep.subr.bf16.mxu0 0
        %1629 = vmatpush2.bf16.msra.mxu0 0
        %1630 = vmatprep.subr.bf16.mxu0 0
        %1631 = vmatpush2.bf16.msra.mxu0 0
        %1632 = vmatprep.subr.bf16.mxu0 0
        %1633 = vmatpush2.bf16.msra.mxu0 0
        %1634 = vmatprep.mubr.bf16.mxu0 0
        %1635 = vmatmul.mubr.bf16.gmra.mxu0 %v1395
        %v1636 = vpop.f32.mrf.mxu0
        %v1637 = vadd.f32 %v1391, %v1636
        %v1638 = vpop.f32.mrf.mxu0
        %v1639 = vadd.f32 %v1391, %v1638
        %v1640 = vpop.f32.mrf.mxu0
        %v1641 = vpop.f32.mrf.mxu0
        %1642 = vdwg.mxu0
        %1643 = vmatprep.subr.bf16.mxu0 0
        %1644 = vmatpush1.bf16.msra.mxu0 0
        %1645 = vmatprep.subr.bf16.mxu0 0
        %1646 = vmatpush1.bf16.msra.mxu0 0
        %1647 = vmatprep.subr.bf16.mxu0 0
        %1648 = vmatpush1.bf16.msra.mxu0 0
        %1649 = vmatprep.subr.bf16.mxu0 0
        %1650 = vmatpush1.bf16.msra.mxu0 0
        %1651 = vmatprep.subr.bf16.mxu0 0
        %1652 = vmatpush1.bf16.msra.mxu0 0
        %1653 = vmatprep.subr.bf16.mxu0 0
        %1654 = vmatpush1.bf16.msra.mxu0 0
        %1655 = vmatprep.subr.bf16.mxu0 0
        %1656 = vmatpush1.bf16.msra.mxu0 0
        %1657 = vmatprep.subr.bf16.mxu0 %v1385
        %1658 = vmatpush1.bf16.msra.mxu0 %v1384
        %1659 = vmatprep.subr.bf16.mxu0 0
        %1660 = vmatpush2.bf16.msra.mxu0 0
        %1661 = vmatprep.subr.bf16.mxu0 0
        %1662 = vmatpush2.bf16.msra.mxu0 0
        %1663 = vmatprep.subr.bf16.mxu0 0
        %1664 = vmatpush2.bf16.msra.mxu0 0
        %1665 = vmatprep.subr.bf16.mxu0 0
        %1666 = vmatpush2.bf16.msra.mxu0 0
        %1667 = vmatprep.subr.bf16.mxu0 0
        %1668 = vmatpush2.bf16.msra.mxu0 0
        %1669 = vmatprep.subr.bf16.mxu0 0
        %1670 = vmatpush2.bf16.msra.mxu0 0
        %1671 = vmatprep.subr.bf16.mxu0 0
        %1672 = vmatpush2.bf16.msra.mxu0 0
        %1673 = vmatprep.subr.bf16.mxu0 0
        %1674 = vmatpush2.bf16.msra.mxu0 0
        %1675 = vmatprep.mubr.bf16.mxu0 0
        %1676 = vmatmul.mubr.bf16.gmra.mxu0 %v1395
        %v1677 = vpop.f32.mrf.mxu0
        %v1678 = vadd.f32 %v1391, %v1677
        %v1679 = vpop.f32.mrf.mxu0
        %v1680 = vadd.f32 %v1391, %v1679
        %v1681 = vpop.f32.mrf.mxu0
        %v1682 = vpop.f32.mrf.mxu0
        %1683 = vdwg.mxu0
        %1684 = vmatprep.subr.bf16.mxu0 0
        %1685 = vmatpush1.bf16.msra.mxu0 0
        %1686 = vmatprep.subr.bf16.mxu0 0
        %1687 = vmatpush1.bf16.msra.mxu0 0
        %1688 = vmatprep.subr.bf16.mxu0 0
        %1689 = vmatpush1.bf16.msra.mxu0 0
        %1690 = vmatprep.subr.bf16.mxu0 0
        %1691 = vmatpush1.bf16.msra.mxu0 0
        %1692 = vmatprep.subr.bf16.mxu0 0
        %1693 = vmatpush1.bf16.msra.mxu0 0
        %1694 = vmatprep.subr.bf16.mxu0 0
        %1695 = vmatpush1.bf16.msra.mxu0 0
        %1696 = vmatprep.subr.bf16.mxu0 0
        %1697 = vmatpush1.bf16.msra.mxu0 0
        %1698 = vmatprep.subr.bf16.mxu0 %v1387
        %1699 = vmatpush1.bf16.msra.mxu0 %v1386
        %1700 = vmatprep.subr.bf16.mxu0 0
        %1701 = vmatpush2.bf16.msra.mxu0 0
        %1702 = vmatprep.subr.bf16.mxu0 0
        %1703 = vmatpush2.bf16.msra.mxu0 0
        %1704 = vmatprep.subr.bf16.mxu0 0
        %1705 = vmatpush2.bf16.msra.mxu0 0
        %1706 = vmatprep.subr.bf16.mxu0 0
        %1707 = vmatpush2.bf16.msra.mxu0 0
        %1708 = vmatprep.subr.bf16.mxu0 0
        %1709 = vmatpush2.bf16.msra.mxu0 0
        %1710 = vmatprep.subr.bf16.mxu0 0
        %1711 = vmatpush2.bf16.msra.mxu0 0
        %1712 = vmatprep.subr.bf16.mxu0 0
        %1713 = vmatpush2.bf16.msra.mxu0 0
        %1714 = vmatprep.subr.bf16.mxu0 0
        %1715 = vmatpush2.bf16.msra.mxu0 0
        %1716 = vmatprep.mubr.bf16.mxu0 0
        %1717 = vmatmul.mubr.bf16.gmra.mxu0 %v1395
        %v1718 = vpop.f32.mrf.mxu0
        %v1719 = vadd.f32 %v1391, %v1718
        %v1720 = vpop.f32.mrf.mxu0
        %v1721 = vadd.f32 %v1391, %v1720
        %v1722 = vpop.f32.mrf.mxu0
        %v1723 = vpop.f32.mrf.mxu0
        %1724 = vdwg.mxu0
        %v1741 = vcombine.low %v1432, %v1434
        %v1742 = vcombine.low %v1473, %v1475
        %v1743 = vcombine.low %v1514, %v1516
        %v1744 = vcombine.low %v1555, %v1557
        %v1745 = vcombine.low %v1596, %v1598
        %v1746 = vcombine.low %v1637, %v1639
        %v1747 = vcombine.low %v1678, %v1680
        %v1748 = vcombine.low %v1719, %v1721
        %1757 = vst [vmem:[%s296] sm:$0xff] %v1741
        %1758 = vst [vmem:[%s296 + $0x8] sm:$0xff] %v1742
        %1759 = vst [vmem:[%s296 + $0x10] sm:$0xff] %v1743
        %1760 = vst [vmem:[%s296 + $0x18] sm:$0xff] %v1744
        %1761 = vst [vmem:[%s296 + $0x20] sm:$0xff] %v1745
        %1762 = vst [vmem:[%s296 + $0x28] sm:$0xff] %v1746
        %1763 = vst [vmem:[%s296 + $0x30] sm:$0xff] %v1747
        %1764 = vst [vmem:[%s296 + $0x38] sm:$0xff] %v1748
        %s1765 = sand.u32 %s197, 1
        %s1766 = scalar_lea.sflag [#allocation3], %s1765
        %s1767 = sand.u32 %s197, 1
        %s1768 = smul.addr %s1767, 64
        %s1769 = scalar_lea.vmem [#allocation2], %s1768
        // Predicated region
        $region49: #{tpu_custom_call.1} parent=47 // pred_check
          %p1770 = pneg %p207
        $region50: #{tpu_custom_call.1} parent=47 // pred_check_branch
          %1772 = sbr.rel (%p1770) target = $region52
        $region51: #{tpu_custom_call.1} parent=47 // pred_region
          %s1773 = smul.u32 16, %s26
          %s1775 = ssub.s32 1024, 1024
          %1776 = vsyncadd %s1766, %s1775
          %s1777 = smul.addr %s25, 16
          %s1778 = sadd.s32 %s1773, %s1777
          %s1779 = smul.addr %s1778, 64
          %s1780 = scalar_lea.hbm %s7, %s1779
          %s1782 = sshll.u32 %s1769, 4
          %s1783 = int_to_ptr.vmem [resolvable:$true] %s1782
          %1785 = dma.vmem_to_hbm [thread:$0]  %s1783, 1024, %s1780, %s1766
        $region52: #{tpu_custom_call.1} parent=47 // pred_fallthru
          _
      $region48: #{tpu_custom_call.1} parent=5 // pred_fallthru
        _
      %p1786 = scmp.le.s32.totalorder 2, %s16
      // Predicated region
      $region53: #{tpu_custom_call.1} parent=5 // pred_check
        %p1787 = pneg %p1786
      $region54: #{tpu_custom_call.1} parent=5 // pred_check_branch
        %1789 = sbr.rel (%p1787) target = $region56
      $region55: #{tpu_custom_call.1} parent=5 // pred_region
        %s1790 = ssub.s32 %s16, 2
        // Predicated region
        $region57: #{tpu_custom_call.1} parent=55 // pred_check
          %p1791 = pneg %p213
        $region58: #{tpu_custom_call.1} parent=55 // pred_check_branch
          %1793 = sbr.rel (%p1791) target = $region60
        $region59: #{tpu_custom_call.1} parent=55 // pred_region
          %s1794 = sand.u32 %s198, 1
          %s1795 = scalar_lea.sflag [#allocation3], %s1794
          %s1796 = sand.u32 %s198, 1
          %s1797 = smul.addr %s1796, 64
          %s1798 = scalar_lea.vmem [#allocation2], %s1797
          %1799 = dma.done %s1795, 1024
        $region60: #{tpu_custom_call.1} parent=55 // pred_fallthru
          _
      $region56: #{tpu_custom_call.1} parent=5 // pred_fallthru
        _
    $region6: #{tpu_custom_call.1} parent=1 // loop_footer
      %s20 = sadd.s32 1, %s16
    $region7: #{tpu_custom_call.1} parent=1 // loop_footer_branch
      %15 = sbr.rel target = $region3
    $region8: #{tpu_custom_call.1} parent=1 // loop_exit
      _
    %1800 = vsyncpa [#allocation3], 1
    %s1801 = scalar_lea.sflag [#allocation3], 1
    %1802 = vsyncpa %s1801, 1

</llo_original>
